<compile_context>
chip_gen: v7x
topology: tpu7x:2x2x1
jax: 0.10.0
libtpu: 0.0.40
codegen_flags: <defaults>
</compile_context>

<pallas_src>
import functools

import jax
import jax.numpy as jnp
from jax.experimental import pallas as pl
from jax.experimental.pallas import tpu as pltpu


def _round_up(x, m):
    return (x + m - 1) // m * m


# ------------------------------ Pallas kernel ------------------------------ #
def _jasper_block_kernel(*refs, num_sub_blocks, kernel_size, pad, halo,
                         seq_tile, window, seq_len):
    """One JasperBlock for one (batch, time-tile) grid point.

    refs layout:
      x_hbm                    (B, Mr + 2H, Cin)  bf16, HBM (pl.ANY), time-padded
      [w_i (K, Cin_i, Cout) bf16, b_i (1, Cout) f32] * R     (VMEM, whole array)
      wres (Cin, Cout) bf16, bres (1, Cout) f32               (VMEM, whole array)
      o_ref                    (1, MT, Cout)      bf16 output tile
      xbuf  scratch            (2, W, Cin)        bf16 double-buffered input window
      h_ref scratch            (W, Cout)          bf16 intermediate activations
      sem   scratch            DMA semaphores (2,)
    """
    R, K, H, MT, W, M = num_sub_blocks, kernel_size, halo, seq_tile, window, seq_len
    x_hbm = refs[0]
    sub_refs = refs[1:1 + 2 * R]
    wres_ref = refs[1 + 2 * R]
    bres_ref = refs[2 + 2 * R]
    o_ref = refs[3 + 2 * R]
    xbuf = refs[4 + 2 * R]
    h_ref = refs[5 + 2 * R]
    sem = refs[6 + 2 * R]

    b = pl.program_id(0)
    t = pl.program_id(1)
    num_t = pl.num_programs(1)
    slot = t % 2

    def start_fetch(tile_idx, sl):
        start = pl.multiple_of(tile_idx * MT, 8)
        pltpu.make_async_copy(x_hbm.at[b, pl.ds(start, W)],
                              xbuf.at[sl], sem.at[sl]).start()

    # Prime the double buffer at the first time-tile of every batch row (keeps the
    # pattern correct if the batch axis is sharded across TensorCores).
    @pl.when(t == 0)
    def _():
        start_fetch(0, 0)

    # Wait for the current window, then prefetch the next one (overlaps compute).
    pltpu.make_async_copy(x_hbm.at[b, pl.ds(0, W)],
                          xbuf.at[slot], sem.at[slot]).wait()

    @pl.when(t + 1 < num_t)
    def _():
        start_fetch(t + 1, 1 - slot)

    def conv_bias(tap, w_ref, b_ref, lo, hi):
        # 'same' 1D conv on window rows [lo, hi): K shifted (rows, Cin)x(Cin, Cout)
        # MXU matmuls, f32 accumulation.  BatchNorm already folded into w/b.
        n = hi - lo
        acc = jnp.dot(tap(lo - pad, n), w_ref[0],
                      preferred_element_type=jnp.float32)
        for k in range(1, K):
            acc = acc + jnp.dot(tap(lo - pad + k, n), w_ref[k],
                                preferred_element_type=jnp.float32)
        return acc + b_ref[...]

    def x_tap(a, n):
        return xbuf[slot, a:a + n, :]

    def h_tap(a, n):
        return h_ref[a:a + n, :]

    for i in range(R):
        # Shrinking-halo schedule: sub-block i is valid on rows [(i+1)p, W-(i+1)p);
        # after the last sub-block that is exactly the output tile [H, H + MT).
        lo = (i + 1) * pad
        hi = W - (i + 1) * pad
        w_ref, b_ref = sub_refs[2 * i], sub_refs[2 * i + 1]
        y = conv_bias(x_tap if i == 0 else h_tap, w_ref, b_ref, lo, hi)
        if i == R - 1:
            # Residual branch (1x1 conv, BN folded) of the block input, computed
            # lazily right before the add so it is never live across sub-blocks.
            res = jnp.dot(xbuf[slot, H:H + MT, :], wres_ref[...],
                          preferred_element_type=jnp.float32) + bres_ref[...]
            y = jnp.maximum(y + res, 0.0)            # ReLU; dropout = identity (eval)
            o_ref[0] = y.astype(o_ref.dtype)         # lane-dense store
        else:
            y = jnp.maximum(y, 0.0)
            # Rows outside the true sequence must be zero so the next conv sees
            # 'same' zero padding (also covers the ragged last tile).
            row = jax.lax.broadcasted_iota(jnp.int32, (hi - lo, 1), 0) + lo
            pos = t * MT - H + row
            y = jnp.where((pos >= 0) & (pos < M), y, 0.0)
            h_ref[lo:hi, :] = y.astype(h_ref.dtype)  # stays in VMEM


# ------------------------------- JAX wrapper -------------------------------- #
def _fold_conv_bn(w, bias, gamma, beta, mean, var, cin_pad, cout_pad, eps=1e-5):
    """Fold eval-mode BatchNorm1d into the preceding Conv1d and pad channels.

    w: (Cout, Cin, K) PyTorch layout -> (K, Cin_pad, Cout_pad) bf16,
    bias -> (1, Cout_pad) f32, such that BN(conv(x) + b) == conv'(x) + b'.
    """
    scale = gamma * jax.lax.rsqrt(var + eps)                    # (Cout,)
    w_f = jnp.transpose(w, (2, 1, 0)) * scale[None, None, :]    # (K, Cin, Cout)
    b_f = (bias - mean) * scale + beta
    _, cin, cout = w_f.shape
    w_f = jnp.pad(w_f, ((0, 0), (0, cin_pad - cin), (0, cout_pad - cout)))
    b_f = jnp.pad(b_f, (0, cout_pad - cout))
    return w_f.astype(jnp.bfloat16), b_f.reshape(1, -1).astype(jnp.float32)


def _jasper_block_forward(h, sub_params, res_params, kernel_size, seq_tile):
    """One fused JasperBlock.  h: (B, M, Cin_pad) bf16, channels-last."""
    B, M, cin_p = h.shape
    K = kernel_size
    assert K % 2 == 1, "only odd kernel sizes supported"
    # TODO(synk): even kernel sizes need PyTorch's asymmetric 'same' padding rule.
    pad = (K - 1) // 2
    R = len(sub_params)
    H = R * pad
    cout_p = sub_params[0][0].shape[-1]

    MT = min(_round_up(seq_tile, 8), _round_up(M, 8))   # time tile (multiple of 8)
    T = -(-M // MT)
    Mr = T * MT
    W = MT + 2 * H                                      # window incl. halo

    # Small time pad only (halo + ragged tail); channels stay padded across blocks.
    x_pad = jnp.pad(h, ((0, 0), (H, H + Mr - M), (0, 0)))

    wres_f, bres_f = res_params
    args = [x_pad]
    in_specs = [pl.BlockSpec(memory_space=pl.ANY)]      # manual overlapping-halo DMA
    for w_f, b_f in sub_params:
        args += [w_f, b_f]
        # Grid-invariant operands: whole-array VMEM residency, no per-step DMA or
        # double buffering.
        in_specs += [pl.BlockSpec(memory_space=pltpu.MemorySpace.VMEM),
                     pl.BlockSpec(memory_space=pltpu.MemorySpace.VMEM)]
    args += [wres_f, bres_f]
    in_specs += [pl.BlockSpec(memory_space=pltpu.MemorySpace.VMEM),
                 pl.BlockSpec(memory_space=pltpu.MemorySpace.VMEM)]
    # TODO(synk): for production Jasper widths (K~29, C~1024) a single folded bf16
    # weight (~60 MiB) approaches v7x's 64 MiB VMEM; stream weights in Cin/Cout
    # tiles from HBM (pltpu.emit_pipeline) instead of whole-array residency.

    flops = 0
    for i, (w_f, _) in enumerate(sub_params):
        rows = W - 2 * (i + 1) * pad
        flops += 2 * rows * K * w_f.shape[1] * cout_p
    flops += 2 * MT * cin_p * cout_p                    # residual 1x1 conv
    flops *= B * T
    bytes_accessed = (2 * B * T * W * cin_p             # bf16 input windows
                      + 2 * B * Mr * cout_p             # bf16 output
                      + sum(2 * w.size + 4 * bb.size for w, bb in sub_params)
                      + 2 * wres_f.size + 4 * bres_f.size)

    kernel = functools.partial(
        _jasper_block_kernel, num_sub_blocks=R, kernel_size=K, pad=pad,
        halo=H, seq_tile=MT, window=W, seq_len=M)

    out = pl.pallas_call(
        kernel,
        out_shape=jax.ShapeDtypeStruct((B, Mr, cout_p), jnp.bfloat16),
        grid_spec=pltpu.PrefetchScalarGridSpec(
            num_scalar_prefetch=0,
            grid=(B, T),
            in_specs=in_specs,
            out_specs=pl.BlockSpec((1, MT, cout_p), lambda b, t: (b, t, 0)),
            scratch_shapes=[pltpu.VMEM((2, W, cin_p), jnp.bfloat16),
                            pltpu.VMEM((W, cout_p), jnp.bfloat16),
                            pltpu.SemaphoreType.DMA((2,))],
        ),
        compiler_params=pltpu.CompilerParams(
            dimension_semantics=("parallel", "arbitrary"),
            vmem_limit_bytes=48 * 1024 * 1024),
        cost_estimate=pl.CostEstimate(flops=int(flops), transcendentals=0,
                                      bytes_accessed=int(bytes_accessed)),
    )(*args)
    return out[:, :M, :]


def jasper_blocks_forward(x, params, seq_tile=512):
    """JasperBlocks forward.  x: [B, in_channels, M] f32 -> [B, C_final, M] f32."""
    B, c_in, M = x.shape
    cin_pad0 = _round_up(c_in, 128)
    h = jnp.transpose(x, (0, 2, 1))                     # channels-last [B, M, C]
    h = jnp.pad(h, ((0, 0), (0, 0), (0, cin_pad0 - c_in))).astype(jnp.bfloat16)
    c_true = c_in
    for subs, res, K in params:
        cout_true = subs[-1]["w"].shape[0]
        cin_pad = _round_up(c_true, 128)
        cout_pad = _round_up(cout_true, 128)
        sub_folded = [
            _fold_conv_bn(p["w"], p["b"], p["gamma"], p["beta"], p["mean"],
                          p["var"],
                          cin_pad=(cin_pad if j == 0 else cout_pad),
                          cout_pad=cout_pad)
            for j, p in enumerate(subs)]
        wres_f, bres_f = _fold_conv_bn(res["w"], res["b"], res["gamma"],
                                       res["beta"], res["mean"], res["var"],
                                       cin_pad=cin_pad, cout_pad=cout_pad)
        wres_f = wres_f[0]                              # (Cin_pad, Cout_pad) 1x1
        h = _jasper_block_forward(h, sub_folded, (wres_f, bres_f), K, seq_tile)
        c_true = cout_true
    out = h[:, :, :c_true].astype(jnp.float32)
    return jnp.transpose(out, (0, 2, 1))


# --------------------------- pure-JAX reference ----------------------------- #
def _conv1d_same_ref(x, w, b):
    """x: (B, Cin, M), w: (Cout, Cin, K) -> (B, Cout, M). 'same', stride 1."""
    K = w.shape[-1]
    pad = (K - 1) // 2
    xp = jnp.pad(x, ((0, 0), (0, 0), (pad, pad)))
    taps = jnp.stack([xp[:, :, k:k + x.shape[-1]] for k in range(K)], axis=-1)
    return jnp.einsum("bcmk,ock->bom", taps, w) + b[None, :, None]


def _bn_eval_ref(x, gamma, beta, mean, var, eps=1e-5):
    inv = jax.lax.rsqrt(var + eps)
    return (x - mean[None, :, None]) * (gamma * inv)[None, :, None] + beta[None, :, None]


def reference_forward(x, params):
    out = x
    for subs, res, _K in params:
        block_in = out
        r = _bn_eval_ref(_conv1d_same_ref(block_in, res["w"], res["b"]),
                         res["gamma"], res["beta"], res["mean"], res["var"])
        for i, p in enumerate(subs):
            out = _bn_eval_ref(_conv1d_same_ref(out, p["w"], p["b"]),
                               p["gamma"], p["beta"], p["mean"], p["var"])
            if i == len(subs) - 1:
                out = out + r
            out = jnp.maximum(out, 0.0)          # ReLU; dropout identity (eval)
    return out


# ----------------------------------- main ------------------------------------ #
if __name__ == "__main__":
    num_blocks = 2
    num_sub_blocks = 2
    in_channels = 16
    channel_inc = 8
    kernel_sizes = [5, 3]
    B, M = 2, 96
    seq_tile = 32            # 3 time tiles per block: exercises halo + prefetch path

    key = jax.random.PRNGKey(0)

    def uniform(k, shape, lo, hi):
        return jax.random.uniform(k, shape, jnp.float32, lo, hi)

    params = []
    for bi in range(num_blocks):
        cin_b = in_channels + channel_inc * bi
        cout_b = in_channels + channel_inc * (bi + 1)
        K = kernel_sizes[bi]
        subs = []
        for r in range(num_sub_blocks):
            cin_r = cin_b if r == 0 else cout_b
            key, k1, k2, k3, k4, k5, k6 = jax.random.split(key, 7)
            bound = 1.0 / float(cin_r * K) ** 0.5
            subs.append(dict(
                w=uniform(k1, (cout_b, cin_r, K), -bound, bound),
                b=uniform(k2, (cout_b,), -bound, bound),
                gamma=uniform(k3, (cout_b,), 0.5, 1.5),
                beta=0.1 * jax.random.normal(k4, (cout_b,), jnp.float32),
                mean=0.1 * jax.random.normal(k5, (cout_b,), jnp.float32),
                var=uniform(k6, (cout_b,), 0.5, 1.5),
            ))
        key, k1, k2, k3, k4, k5, k6 = jax.random.split(key, 7)
        bound = 1.0 / float(cin_b) ** 0.5
        res = dict(
            w=uniform(k1, (cout_b, cin_b, 1), -bound, bound),
            b=uniform(k2, (cout_b,), -bound, bound),
            gamma=uniform(k3, (cout_b,), 0.5, 1.5),
            beta=0.1 * jax.random.normal(k4, (cout_b,), jnp.float32),
            mean=0.1 * jax.random.normal(k5, (cout_b,), jnp.float32),
            var=uniform(k6, (cout_b,), 0.5, 1.5),
        )
        params.append((subs, res, K))

    key, kx = jax.random.split(key)
    x = jax.random.normal(kx, (B, in_channels, M), jnp.float32)

    out = jasper_blocks_forward(x, params, seq_tile=seq_tile)
    out = jax.block_until_ready(out)

    ref = reference_forward(x, params)
    expected_shape = (B, in_channels + channel_inc * num_blocks, M)
    assert out.shape == expected_shape and ref.shape == expected_shape
    max_err = jnp.max(jnp.abs(out - ref))
    # bf16 weight/activation storage (f32 accumulation) -> loosened tolerance.
    assert jnp.allclose(out, ref, atol=5e-2, rtol=5e-2), (
        f"mismatch vs reference, max abs err {max_err}")

    print("KERNEL_OK")
</pallas_src>

<mosaic_0001>
module attributes {stable_mosaic.version = 11 : i64} {
  func.func @_jasper_block_kernel(%arg0: i32, %arg1: i32, %arg2: memref<2x104x128xbf16, #tpu.memory_space<any>>, %arg3: memref<5x128x128xbf16, #tpu.memory_space<vmem>>, %arg4: memref<1x128xf32, #tpu.memory_space<vmem>>, %arg5: memref<5x128x128xbf16, #tpu.memory_space<vmem>>, %arg6: memref<1x128xf32, #tpu.memory_space<vmem>>, %arg7: memref<128x128xbf16, #tpu.memory_space<vmem>>, %arg8: memref<1x128xf32, #tpu.memory_space<vmem>>, %arg9: memref<1x32x128xbf16, #tpu.memory_space<vmem>>, %arg10: memref<2x40x128xbf16, #tpu.memory_space<vmem>>, %arg11: memref<40x128xbf16, #tpu.memory_space<vmem>>, %arg12: memref<2x!tpu.dma_semaphore, #tpu.memory_space<semaphore_mem>>) attributes {dimension_semantics = [#tpu.dimension_semantics<parallel>, #tpu.dimension_semantics<arbitrary>], iteration_bounds = array<i64: 2, 3>, scalar_prefetch = 0 : i64, scratch_operands = 3 : i64, tpu.core_type = #tpu.core_type<tc>, window_params = [{}, {pipeline_mode = #tpu.pipeline_mode<synchronous>, transform_indices = @transform_1, window_bounds = array<i64: 5, 128, 128>}, {pipeline_mode = #tpu.pipeline_mode<synchronous>, transform_indices = @transform_2, window_bounds = array<i64: 1, 128>}, {pipeline_mode = #tpu.pipeline_mode<synchronous>, transform_indices = @transform_3, window_bounds = array<i64: 5, 128, 128>}, {pipeline_mode = #tpu.pipeline_mode<synchronous>, transform_indices = @transform_4, window_bounds = array<i64: 1, 128>}, {pipeline_mode = #tpu.pipeline_mode<synchronous>, transform_indices = @transform_5, window_bounds = array<i64: 128, 128>}, {pipeline_mode = #tpu.pipeline_mode<synchronous>, transform_indices = @transform_6, window_bounds = array<i64: 1, 128>}, {transform_indices = @transform_7, window_bounds = array<i64: 1, 32, 128>}]} {
    %c2_i32 = arith.constant 2 : i32
    %c0_i32 = arith.constant 0 : i32
    %0 = arith.cmpi eq, %c2_i32, %c0_i32 : i32
    %c1_i32 = arith.constant 1 : i32
    %1 = arith.select %0, %c1_i32, %c2_i32 : i32
    %2 = arith.remsi %arg1, %1 : i32
    %c0_i32_0 = arith.constant 0 : i32
    %3 = arith.cmpi ne, %2, %c0_i32_0 : i32
    %c0_i32_1 = arith.constant 0 : i32
    %4 = arith.cmpi slt, %2, %c0_i32_1 : i32
    %c0_i32_2 = arith.constant 0 : i32
    %5 = arith.cmpi slt, %1, %c0_i32_2 : i32
    %6 = arith.xori %4, %5 : i1
    %7 = arith.andi %6, %3 : i1
    %8 = arith.addi %2, %1 : i32
    %9 = arith.select %7, %8, %2 : i32
    %c0_i32_3 = arith.constant 0 : i32
    %10 = arith.cmpi eq, %arg1, %c0_i32_3 : i32
    %11 = arith.extui %10 : i1 to i32
    %c0_i32_4 = arith.constant 0 : i32
    %12 = arith.cmpi ne, %11, %c0_i32_4 : i32
    scf.if %12 {
      %c0_i32_84 = arith.constant 0 : i32
      %122 = tpu.assume_multiple %c0_i32_84, 8 : i32
      %c0_i32_85 = arith.constant 0 : i32
      %c0_i32_86 = arith.constant 0 : i32
      %c0_i32_87 = arith.constant 0 : i32
      %123 = tpu.memref_slice %arg2[%arg0, %122, %c0_i32_87] : memref<2x104x128xbf16, #tpu.memory_space<any>> -> memref<1x40x128xbf16, #tpu.memory_space<any>>
      %124 = tpu.memref_squeeze %123 : memref<1x40x128xbf16, #tpu.memory_space<any>> -> memref<40x128xbf16, #tpu.memory_space<any>>
      %c0_i32_88 = arith.constant 0 : i32
      %c0_i32_89 = arith.constant 0 : i32
      %125 = tpu.memref_slice %arg10[%c0_i32_85, %c0_i32_88, %c0_i32_89] : memref<2x40x128xbf16, #tpu.memory_space<vmem>> -> memref<1x40x128xbf16, #tpu.memory_space<vmem>>
      %126 = tpu.memref_squeeze %125 : memref<1x40x128xbf16, #tpu.memory_space<vmem>> -> memref<40x128xbf16, #tpu.memory_space<vmem>>
      %127 = tpu.memref_slice %arg12[%c0_i32_86] : memref<2x!tpu.dma_semaphore, #tpu.memory_space<semaphore_mem>> -> memref<1x!tpu.dma_semaphore, #tpu.memory_space<semaphore_mem>>
      %128 = tpu.memref_squeeze %127 : memref<1x!tpu.dma_semaphore, #tpu.memory_space<semaphore_mem>> -> memref<!tpu.dma_semaphore, #tpu.memory_space<semaphore_mem>>
      tpu.enqueue_dma source(%124 : memref<40x128xbf16, #tpu.memory_space<any>>) target(%126 : memref<40x128xbf16, #tpu.memory_space<vmem>>) target_semaphore(%128 : memref<!tpu.dma_semaphore, #tpu.memory_space<semaphore_mem>>)
    } else {
    }
    %c0_i32_5 = arith.constant 0 : i32
    %c0_i32_6 = arith.constant 0 : i32
    %13 = tpu.memref_slice %arg2[%arg0, %c0_i32_5, %c0_i32_6] : memref<2x104x128xbf16, #tpu.memory_space<any>> -> memref<1x40x128xbf16, #tpu.memory_space<any>>
    %14 = tpu.memref_squeeze %13 : memref<1x40x128xbf16, #tpu.memory_space<any>> -> memref<40x128xbf16, #tpu.memory_space<any>>
    %c0_i32_7 = arith.constant 0 : i32
    %c0_i32_8 = arith.constant 0 : i32
    %15 = tpu.memref_slice %arg10[%9, %c0_i32_7, %c0_i32_8] : memref<2x40x128xbf16, #tpu.memory_space<vmem>> -> memref<1x40x128xbf16, #tpu.memory_space<vmem>>
    %16 = tpu.memref_squeeze %15 : memref<1x40x128xbf16, #tpu.memory_space<vmem>> -> memref<40x128xbf16, #tpu.memory_space<vmem>>
    %17 = tpu.memref_slice %arg12[%9] : memref<2x!tpu.dma_semaphore, #tpu.memory_space<semaphore_mem>> -> memref<1x!tpu.dma_semaphore, #tpu.memory_space<semaphore_mem>>
    %18 = tpu.memref_squeeze %17 : memref<1x!tpu.dma_semaphore, #tpu.memory_space<semaphore_mem>> -> memref<!tpu.dma_semaphore, #tpu.memory_space<semaphore_mem>>
    tpu.wait_dma2 semaphore(%18 : memref<!tpu.dma_semaphore, #tpu.memory_space<semaphore_mem>>) src(%14 : memref<40x128xbf16, #tpu.memory_space<any>>) dst(%16 : memref<40x128xbf16, #tpu.memory_space<vmem>>)
    %c1_i32_9 = arith.constant 1 : i32
    %19 = arith.addi %arg1, %c1_i32_9 : i32
    %c3_i32 = arith.constant 3 : i32
    %20 = arith.cmpi slt, %19, %c3_i32 : i32
    %21 = arith.extui %20 : i1 to i32
    %c0_i32_10 = arith.constant 0 : i32
    %22 = arith.cmpi ne, %21, %c0_i32_10 : i32
    scf.if %22 {
      %c1_i32_84 = arith.constant 1 : i32
      %122 = arith.addi %arg1, %c1_i32_84 : i32
      %c1_i32_85 = arith.constant 1 : i32
      %123 = arith.subi %c1_i32_85, %9 : i32
      %c32_i32_86 = arith.constant 32 : i32
      %124 = arith.muli %122, %c32_i32_86 : i32
      %125 = tpu.assume_multiple %124, 8 : i32
      %c0_i32_87 = arith.constant 0 : i32
      %126 = tpu.memref_slice %arg2[%arg0, %125, %c0_i32_87] : memref<2x104x128xbf16, #tpu.memory_space<any>> -> memref<1x40x128xbf16, #tpu.memory_space<any>>
      %127 = tpu.memref_squeeze %126 : memref<1x40x128xbf16, #tpu.memory_space<any>> -> memref<40x128xbf16, #tpu.memory_space<any>>
      %c0_i32_88 = arith.constant 0 : i32
      %c0_i32_89 = arith.constant 0 : i32
      %128 = tpu.memref_slice %arg10[%123, %c0_i32_88, %c0_i32_89] : memref<2x40x128xbf16, #tpu.memory_space<vmem>> -> memref<1x40x128xbf16, #tpu.memory_space<vmem>>
      %129 = tpu.memref_squeeze %128 : memref<1x40x128xbf16, #tpu.memory_space<vmem>> -> memref<40x128xbf16, #tpu.memory_space<vmem>>
      %130 = tpu.memref_slice %arg12[%123] : memref<2x!tpu.dma_semaphore, #tpu.memory_space<semaphore_mem>> -> memref<1x!tpu.dma_semaphore, #tpu.memory_space<semaphore_mem>>
      %131 = tpu.memref_squeeze %130 : memref<1x!tpu.dma_semaphore, #tpu.memory_space<semaphore_mem>> -> memref<!tpu.dma_semaphore, #tpu.memory_space<semaphore_mem>>
      tpu.enqueue_dma source(%127 : memref<40x128xbf16, #tpu.memory_space<any>>) target(%129 : memref<40x128xbf16, #tpu.memory_space<vmem>>) target_semaphore(%131 : memref<!tpu.dma_semaphore, #tpu.memory_space<semaphore_mem>>)
    } else {
    }
    %23 = arith.index_cast %9 : i32 to index
    %c0 = arith.constant 0 : index
    %c0_11 = arith.constant 0 : index
    %24 = vector.load %arg10[%23, %c0, %c0_11] : memref<2x40x128xbf16, #tpu.memory_space<vmem>>, vector<1x36x128xbf16>
    %25 = vector.shape_cast %24 : vector<1x36x128xbf16> to vector<36x128xbf16>
    %c0_12 = arith.constant 0 : index
    %c0_13 = arith.constant 0 : index
    %c0_14 = arith.constant 0 : index
    %26 = vector.load %arg3[%c0_12, %c0_13, %c0_14] : memref<5x128x128xbf16, #tpu.memory_space<vmem>>, vector<1x128x128xbf16>
    %27 = vector.shape_cast %26 : vector<1x128x128xbf16> to vector<128x128xbf16>
    %cst = arith.constant dense<0.000000e+00> : vector<36x128xf32>
    %28 = tpu.matmul %25, %27, %cst {dimension_numbers = #tpu.dot_dimension_numbers<[1], [0], [0], [1], [0, 0, 1, 1], [], []>} : vector<36x128xbf16>, vector<128x128xbf16>, vector<36x128xf32> -> vector<36x128xf32>
    %29 = arith.index_cast %9 : i32 to index
    %c1 = arith.constant 1 : index
    %c0_15 = arith.constant 0 : index
    %30 = vector.load %arg10[%29, %c1, %c0_15] : memref<2x40x128xbf16, #tpu.memory_space<vmem>>, vector<1x36x128xbf16>
    %31 = vector.shape_cast %30 : vector<1x36x128xbf16> to vector<36x128xbf16>
    %c1_16 = arith.constant 1 : index
    %c0_17 = arith.constant 0 : index
    %c0_18 = arith.constant 0 : index
    %32 = vector.load %arg3[%c1_16, %c0_17, %c0_18] : memref<5x128x128xbf16, #tpu.memory_space<vmem>>, vector<1x128x128xbf16>
    %33 = vector.shape_cast %32 : vector<1x128x128xbf16> to vector<128x128xbf16>
    %cst_19 = arith.constant dense<0.000000e+00> : vector<36x128xf32>
    %34 = tpu.matmul %31, %33, %cst_19 {dimension_numbers = #tpu.dot_dimension_numbers<[1], [0], [0], [1], [0, 0, 1, 1], [], []>} : vector<36x128xbf16>, vector<128x128xbf16>, vector<36x128xf32> -> vector<36x128xf32>
    %35 = arith.addf %28, %34 : vector<36x128xf32>
    %36 = arith.index_cast %9 : i32 to index
    %c2 = arith.constant 2 : index
    %c0_20 = arith.constant 0 : index
    %37 = vector.load %arg10[%36, %c2, %c0_20] : memref<2x40x128xbf16, #tpu.memory_space<vmem>>, vector<1x36x128xbf16>
    %38 = vector.shape_cast %37 : vector<1x36x128xbf16> to vector<36x128xbf16>
    %c2_21 = arith.constant 2 : index
    %c0_22 = arith.constant 0 : index
    %c0_23 = arith.constant 0 : index
    %39 = vector.load %arg3[%c2_21, %c0_22, %c0_23] : memref<5x128x128xbf16, #tpu.memory_space<vmem>>, vector<1x128x128xbf16>
    %40 = vector.shape_cast %39 : vector<1x128x128xbf16> to vector<128x128xbf16>
    %cst_24 = arith.constant dense<0.000000e+00> : vector<36x128xf32>
    %41 = tpu.matmul %38, %40, %cst_24 {dimension_numbers = #tpu.dot_dimension_numbers<[1], [0], [0], [1], [0, 0, 1, 1], [], []>} : vector<36x128xbf16>, vector<128x128xbf16>, vector<36x128xf32> -> vector<36x128xf32>
    %42 = arith.addf %35, %41 : vector<36x128xf32>
    %43 = arith.index_cast %9 : i32 to index
    %c3 = arith.constant 3 : index
    %c0_25 = arith.constant 0 : index
    %44 = vector.load %arg10[%43, %c3, %c0_25] : memref<2x40x128xbf16, #tpu.memory_space<vmem>>, vector<1x36x128xbf16>
    %45 = vector.shape_cast %44 : vector<1x36x128xbf16> to vector<36x128xbf16>
    %c3_26 = arith.constant 3 : index
    %c0_27 = arith.constant 0 : index
    %c0_28 = arith.constant 0 : index
    %46 = vector.load %arg3[%c3_26, %c0_27, %c0_28] : memref<5x128x128xbf16, #tpu.memory_space<vmem>>, vector<1x128x128xbf16>
    %47 = vector.shape_cast %46 : vector<1x128x128xbf16> to vector<128x128xbf16>
    %cst_29 = arith.constant dense<0.000000e+00> : vector<36x128xf32>
    %48 = tpu.matmul %45, %47, %cst_29 {dimension_numbers = #tpu.dot_dimension_numbers<[1], [0], [0], [1], [0, 0, 1, 1], [], []>} : vector<36x128xbf16>, vector<128x128xbf16>, vector<36x128xf32> -> vector<36x128xf32>
    %49 = arith.addf %42, %48 : vector<36x128xf32>
    %50 = arith.index_cast %9 : i32 to index
    %c4 = arith.constant 4 : index
    %c0_30 = arith.constant 0 : index
    %51 = vector.load %arg10[%50, %c4, %c0_30] : memref<2x40x128xbf16, #tpu.memory_space<vmem>>, vector<1x36x128xbf16>
    %52 = vector.shape_cast %51 : vector<1x36x128xbf16> to vector<36x128xbf16>
    %c4_31 = arith.constant 4 : index
    %c0_32 = arith.constant 0 : index
    %c0_33 = arith.constant 0 : index
    %53 = vector.load %arg3[%c4_31, %c0_32, %c0_33] : memref<5x128x128xbf16, #tpu.memory_space<vmem>>, vector<1x128x128xbf16>
    %54 = vector.shape_cast %53 : vector<1x128x128xbf16> to vector<128x128xbf16>
    %cst_34 = arith.constant dense<0.000000e+00> : vector<36x128xf32>
    %55 = tpu.matmul %52, %54, %cst_34 {dimension_numbers = #tpu.dot_dimension_numbers<[1], [0], [0], [1], [0, 0, 1, 1], [], []>} : vector<36x128xbf16>, vector<128x128xbf16>, vector<36x128xf32> -> vector<36x128xf32>
    %56 = arith.addf %49, %55 : vector<36x128xf32>
    %c0_35 = arith.constant 0 : index
    %c0_36 = arith.constant 0 : index
    %57 = vector.load %arg4[%c0_35, %c0_36] : memref<1x128xf32, #tpu.memory_space<vmem>>, vector<1x128xf32>
    %58 = vector.broadcast %57 : vector<1x128xf32> to vector<36x128xf32>
    %59 = arith.addf %56, %58 : vector<36x128xf32>
    %cst_37 = arith.constant 0.000000e+00 : f32
    %60 = vector.broadcast %cst_37 : f32 to vector<36x128xf32>
    %61 = arith.maximumf %59, %60 : vector<36x128xf32>
    %62 = tpu.iota {dimensions = array<i32: 0>} : vector<36x1xi32>
    %c2_i32_38 = arith.constant 2 : i32
    %63 = vector.broadcast %c2_i32_38 : i32 to vector<36x1xi32>
    %64 = arith.addi %62, %63 : vector<36x1xi32>
    %c32_i32 = arith.constant 32 : i32
    %65 = arith.muli %arg1, %c32_i32 : i32
    %c4_i32 = arith.constant 4 : i32
    %66 = arith.subi %65, %c4_i32 : i32
    %67 = vector.broadcast %66 : i32 to vector<36x1xi32>
    %68 = arith.addi %67, %64 : vector<36x1xi32>
    %c0_i32_39 = arith.constant 0 : i32
    %69 = vector.broadcast %c0_i32_39 : i32 to vector<36x1xi32>
    %70 = arith.cmpi sge, %68, %69 : vector<36x1xi32>
    %c96_i32 = arith.constant 96 : i32
    %71 = vector.broadcast %c96_i32 : i32 to vector<36x1xi32>
    %72 = arith.cmpi slt, %68, %71 : vector<36x1xi32>
    %73 = arith.andi %70, %72 : vector<36x1xi1>
    %cst_40 = arith.constant 0.000000e+00 : f32
    %74 = vector.shape_cast %73 : vector<36x1xi1> to vector<36x1xi1>
    %75 = vector.broadcast %74 : vector<36x1xi1> to vector<36x128xi1>
    %76 = vector.broadcast %cst_40 : f32 to vector<36x128xf32>
    %77 = arith.select %75, %61, %76 : vector<36x128xi1>, vector<36x128xf32>
    %78 = arith.truncf %77 : vector<36x128xf32> to vector<36x128xbf16>
    %c2_41 = arith.constant 2 : index
    %c0_42 = arith.constant 0 : index
    %79 = vector.load %arg11[%c2_41, %c0_42] : memref<40x128xbf16, #tpu.memory_space<vmem>>, vector<36x128xbf16>
    tpu.vector_store %arg11[%c2_41, %c0_42], %78 {strides = array<i32>} : memref<40x128xbf16, #tpu.memory_space<vmem>>, vector<36x128xbf16>,
    %c2_43 = arith.constant 2 : index
    %c0_44 = arith.constant 0 : index
    %80 = vector.load %arg11[%c2_43, %c0_44] : memref<40x128xbf16, #tpu.memory_space<vmem>>, vector<32x128xbf16>
    %c0_45 = arith.constant 0 : index
    %c0_46 = arith.constant 0 : index
    %c0_47 = arith.constant 0 : index
    %81 = vector.load %arg5[%c0_45, %c0_46, %c0_47] : memref<5x128x128xbf16, #tpu.memory_space<vmem>>, vector<1x128x128xbf16>
    %82 = vector.shape_cast %81 : vector<1x128x128xbf16> to vector<128x128xbf16>
    %cst_48 = arith.constant dense<0.000000e+00> : vector<32x128xf32>
    %83 = tpu.matmul %80, %82, %cst_48 {dimension_numbers = #tpu.dot_dimension_numbers<[1], [0], [0], [1], [0, 0, 1, 1], [], []>} : vector<32x128xbf16>, vector<128x128xbf16>, vector<32x128xf32> -> vector<32x128xf32>
    %c3_49 = arith.constant 3 : index
    %c0_50 = arith.constant 0 : index
    %84 = vector.load %arg11[%c3_49, %c0_50] : memref<40x128xbf16, #tpu.memory_space<vmem>>, vector<32x128xbf16>
    %c1_51 = arith.constant 1 : index
    %c0_52 = arith.constant 0 : index
    %c0_53 = arith.constant 0 : index
    %85 = vector.load %arg5[%c1_51, %c0_52, %c0_53] : memref<5x128x128xbf16, #tpu.memory_space<vmem>>, vector<1x128x128xbf16>
    %86 = vector.shape_cast %85 : vector<1x128x128xbf16> to vector<128x128xbf16>
    %cst_54 = arith.constant dense<0.000000e+00> : vector<32x128xf32>
    %87 = tpu.matmul %84, %86, %cst_54 {dimension_numbers = #tpu.dot_dimension_numbers<[1], [0], [0], [1], [0, 0, 1, 1], [], []>} : vector<32x128xbf16>, vector<128x128xbf16>, vector<32x128xf32> -> vector<32x128xf32>
    %88 = arith.addf %83, %87 : vector<32x128xf32>
    %c4_55 = arith.constant 4 : index
    %c0_56 = arith.constant 0 : index
    %89 = vector.load %arg11[%c4_55, %c0_56] : memref<40x128xbf16, #tpu.memory_space<vmem>>, vector<32x128xbf16>
    %c2_57 = arith.constant 2 : index
    %c0_58 = arith.constant 0 : index
    %c0_59 = arith.constant 0 : index
    %90 = vector.load %arg5[%c2_57, %c0_58, %c0_59] : memref<5x128x128xbf16, #tpu.memory_space<vmem>>, vector<1x128x128xbf16>
    %91 = vector.shape_cast %90 : vector<1x128x128xbf16> to vector<128x128xbf16>
    %cst_60 = arith.constant dense<0.000000e+00> : vector<32x128xf32>
    %92 = tpu.matmul %89, %91, %cst_60 {dimension_numbers = #tpu.dot_dimension_numbers<[1], [0], [0], [1], [0, 0, 1, 1], [], []>} : vector<32x128xbf16>, vector<128x128xbf16>, vector<32x128xf32> -> vector<32x128xf32>
    %93 = arith.addf %88, %92 : vector<32x128xf32>
    %c5 = arith.constant 5 : index
    %c0_61 = arith.constant 0 : index
    %94 = vector.load %arg11[%c5, %c0_61] : memref<40x128xbf16, #tpu.memory_space<vmem>>, vector<32x128xbf16>
    %c3_62 = arith.constant 3 : index
    %c0_63 = arith.constant 0 : index
    %c0_64 = arith.constant 0 : index
    %95 = vector.load %arg5[%c3_62, %c0_63, %c0_64] : memref<5x128x128xbf16, #tpu.memory_space<vmem>>, vector<1x128x128xbf16>
    %96 = vector.shape_cast %95 : vector<1x128x128xbf16> to vector<128x128xbf16>
    %cst_65 = arith.constant dense<0.000000e+00> : vector<32x128xf32>
    %97 = tpu.matmul %94, %96, %cst_65 {dimension_numbers = #tpu.dot_dimension_numbers<[1], [0], [0], [1], [0, 0, 1, 1], [], []>} : vector<32x128xbf16>, vector<128x128xbf16>, vector<32x128xf32> -> vector<32x128xf32>
    %98 = arith.addf %93, %97 : vector<32x128xf32>
    %c6 = arith.constant 6 : index
    %c0_66 = arith.constant 0 : index
    %99 = vector.load %arg11[%c6, %c0_66] : memref<40x128xbf16, #tpu.memory_space<vmem>>, vector<32x128xbf16>
    %c4_67 = arith.constant 4 : index
    %c0_68 = arith.constant 0 : index
    %c0_69 = arith.constant 0 : index
    %100 = vector.load %arg5[%c4_67, %c0_68, %c0_69] : memref<5x128x128xbf16, #tpu.memory_space<vmem>>, vector<1x128x128xbf16>
    %101 = vector.shape_cast %100 : vector<1x128x128xbf16> to vector<128x128xbf16>
    %cst_70 = arith.constant dense<0.000000e+00> : vector<32x128xf32>
    %102 = tpu.matmul %99, %101, %cst_70 {dimension_numbers = #tpu.dot_dimension_numbers<[1], [0], [0], [1], [0, 0, 1, 1], [], []>} : vector<32x128xbf16>, vector<128x128xbf16>, vector<32x128xf32> -> vector<32x128xf32>
    %103 = arith.addf %98, %102 : vector<32x128xf32>
    %c0_71 = arith.constant 0 : index
    %c0_72 = arith.constant 0 : index
    %104 = vector.load %arg6[%c0_71, %c0_72] : memref<1x128xf32, #tpu.memory_space<vmem>>, vector<1x128xf32>
    %105 = vector.broadcast %104 : vector<1x128xf32> to vector<32x128xf32>
    %106 = arith.addf %103, %105 : vector<32x128xf32>
    %107 = arith.index_cast %9 : i32 to index
    %c4_73 = arith.constant 4 : index
    %c0_74 = arith.constant 0 : index
    %108 = vector.load %arg10[%107, %c4_73, %c0_74] : memref<2x40x128xbf16, #tpu.memory_space<vmem>>, vector<1x32x128xbf16>
    %109 = vector.shape_cast %108 : vector<1x32x128xbf16> to vector<32x128xbf16>
    %c0_75 = arith.constant 0 : index
    %c0_76 = arith.constant 0 : index
    %110 = vector.load %arg7[%c0_75, %c0_76] : memref<128x128xbf16, #tpu.memory_space<vmem>>, vector<128x128xbf16>
    %cst_77 = arith.constant dense<0.000000e+00> : vector<32x128xf32>
    %111 = tpu.matmul %109, %110, %cst_77 {dimension_numbers = #tpu.dot_dimension_numbers<[1], [0], [0], [1], [0, 0, 1, 1], [], []>} : vector<32x128xbf16>, vector<128x128xbf16>, vector<32x128xf32> -> vector<32x128xf32>
    %c0_78 = arith.constant 0 : index
    %c0_79 = arith.constant 0 : index
    %112 = vector.load %arg8[%c0_78, %c0_79] : memref<1x128xf32, #tpu.memory_space<vmem>>, vector<1x128xf32>
    %113 = vector.broadcast %112 : vector<1x128xf32> to vector<32x128xf32>
    %114 = arith.addf %111, %113 : vector<32x128xf32>
    %115 = arith.addf %106, %114 : vector<32x128xf32>
    %cst_80 = arith.constant 0.000000e+00 : f32
    %116 = vector.broadcast %cst_80 : f32 to vector<32x128xf32>
    %117 = arith.maximumf %115, %116 : vector<32x128xf32>
    %118 = arith.truncf %117 : vector<32x128xf32> to vector<32x128xbf16>
    %c0_81 = arith.constant 0 : index
    %c0_82 = arith.constant 0 : index
    %c0_83 = arith.constant 0 : index
    %119 = vector.load %arg9[%c0_81, %c0_82, %c0_83] : memref<1x32x128xbf16, #tpu.memory_space<vmem>>, vector<1x32x128xbf16>
    %120 = vector.shape_cast %119 : vector<1x32x128xbf16> to vector<32x128xbf16>
    %121 = vector.shape_cast %118 : vector<32x128xbf16> to vector<1x32x128xbf16>
    tpu.vector_store %arg9[%c0_81, %c0_82, %c0_83], %121 {strides = array<i32>} : memref<1x32x128xbf16, #tpu.memory_space<vmem>>, vector<1x32x128xbf16>,
    return
  }
  func.func @transform_1(%arg0: i32, %arg1: i32) -> (i32, i32, i32) {
    %c0_i32 = arith.constant 0 : i32
    %c0_i32_0 = arith.constant 0 : i32
    %c0_i32_1 = arith.constant 0 : i32
    %c0_i32_2 = arith.constant 0 : i32
    return %c0_i32, %c0_i32_0, %c0_i32_1 : i32, i32, i32
  }
  func.func @transform_2(%arg0: i32, %arg1: i32) -> (i32, i32) {
    %c0_i32 = arith.constant 0 : i32
    %c0_i32_0 = arith.constant 0 : i32
    %c0_i32_1 = arith.constant 0 : i32
    return %c0_i32, %c0_i32_0 : i32, i32
  }
  func.func @transform_3(%arg0: i32, %arg1: i32) -> (i32, i32, i32) {
    %c0_i32 = arith.constant 0 : i32
    %c0_i32_0 = arith.constant 0 : i32
    %c0_i32_1 = arith.constant 0 : i32
    %c0_i32_2 = arith.constant 0 : i32
    return %c0_i32, %c0_i32_0, %c0_i32_1 : i32, i32, i32
  }
  func.func @transform_4(%arg0: i32, %arg1: i32) -> (i32, i32) {
    %c0_i32 = arith.constant 0 : i32
    %c0_i32_0 = arith.constant 0 : i32
    %c0_i32_1 = arith.constant 0 : i32
    return %c0_i32, %c0_i32_0 : i32, i32
  }
  func.func @transform_5(%arg0: i32, %arg1: i32) -> (i32, i32) {
    %c0_i32 = arith.constant 0 : i32
    %c0_i32_0 = arith.constant 0 : i32
    %c0_i32_1 = arith.constant 0 : i32
    return %c0_i32, %c0_i32_0 : i32, i32
  }
  func.func @transform_6(%arg0: i32, %arg1: i32) -> (i32, i32) {
    %c0_i32 = arith.constant 0 : i32
    %c0_i32_0 = arith.constant 0 : i32
    %c0_i32_1 = arith.constant 0 : i32
    return %c0_i32, %c0_i32_0 : i32, i32
  }
  func.func @transform_7(%arg0: i32, %arg1: i32) -> (i32, i32, i32) {
    %c0_i32 = arith.constant 0 : i32
    %c0_i32_0 = arith.constant 0 : i32
    return %arg0, %arg1, %c0_i32 : i32, i32, i32
  }
}

</mosaic_0001>

<llo_original>
// kernel: tpu_custom_call.1
$region0: #{tpu_custom_call.1}
  #allocation0 [shape = 'u32[]', space=smem, size = 0x4, offset = 0x4, fixed_abs, tag = 'smem constant byte address 0x4 - core index']
  #allocation1 [shape = 'u32[144,128]{1,0:T(1,128)}', space=vmem, size = 0x12000, scoped, tag = 'internal scratch']
  #allocation2 [shape = 'bf16[2,40,128]{2,1,0:T(8,128)(2,1)}', space=vmem, size = 0x5000, scoped, tag = 'scratch operand']
  #allocation3 [shape = 'bf16[40,128]{1,0:T(8,128)(2,1)}', space=vmem, size = 0x2800, scoped, tag = 'scratch operand']
  #allocation4 [shape = 's32[2]{0}', space=sflag, size = 0x8, scoped, tag = 'scratch operand']
  #allocation12 [shape = 's32[]', space=sflag, size = 0x4, offset = 0, fixed_abs, tag = 'sflag constant byte address 0x0 - dummy sync flag']
  #allocation13 [shape = 's32[]', space=sflag, size = 0x4, offset = 0, fixed_abs, tag = 'sflag constant byte address 0x0 - dummy sync flag']
  #allocation14 [shape = 'u32[]', space=smem, size = 0x4, offset = 0x44, fixed_abs, tag = 'smem constant byte address 0x44 - assertion arg 0']
  #allocation15 [shape = 'u32[]', space=smem, size = 0x4, offset = 0x48, fixed_abs, tag = 'smem constant byte address 0x48 - assertion arg 1']
  #allocation16 [shape = 's32[]', space=sflag, size = 0x4, offset = 0, fixed_abs, tag = 'sflag constant byte address 0x0 - dummy sync flag']
  #allocation17 [shape = 's32[]', space=sflag, size = 0x4, offset = 0, fixed_abs, tag = 'sflag constant byte address 0x0 - dummy sync flag']
  %s0 = inlined_call_operand.hbm [shape: bf16[2,104,128], index: 0, kind: input, shape index: {}]
  %s1 = inlined_call_operand.hbm [shape: bf16[5,128,128], index: 1, kind: input, shape index: {}]
  %s2 = inlined_call_operand.vmem [shape: f32[1,128], index: 2, kind: input, shape index: {}]
  %s3 = inlined_call_operand.hbm [shape: bf16[5,128,128], index: 3, kind: input, shape index: {}]
  %s4 = inlined_call_operand.vmem [shape: f32[1,128], index: 4, kind: input, shape index: {}]
  %s5 = inlined_call_operand.hbm [shape: bf16[128,128], index: 5, kind: input, shape index: {}]
  %s6 = inlined_call_operand.vmem [shape: f32[1,128], index: 6, kind: input, shape index: {}]
  %s7 = inlined_call_operand.hbm [shape: bf16[2,96,128], index: 7, kind: output, shape index: {}]
  %s8 = sld [smem:[#allocation0]]
  $region85: #{tpu_custom_call.1} parent=0
    _
  %s10 = ssub.s32 1, %s8
  %s11 = scalar_select 0, %s10, %s8
  $region1: #{tpu_custom_call.1} parent=0
    #allocation5 [shape = 'u8[163840]{0}', space=vmem, size = 0x28000, scoped, tag = 'input window, operand 1, single buffered']
    #allocation6 [shape = 's32[2]{0}', space=sflag, size = 0x8, scoped, tag = 'scoped memory for tpu_custom_call.1']
    #allocation7 [shape = 's32[2]{0}', space=sflag, size = 0x8, scoped, tag = 'scoped memory for tpu_custom_call.1']
    #allocation8 [shape = 'u8[163840]{0}', space=vmem, size = 0x28000, scoped, tag = 'input window, operand 3, single buffered']
    #allocation9 [shape = 's32[1]{0}', space=sflag, size = 0x4, scoped, tag = 'scoped memory for tpu_custom_call.1']
    #allocation10 [shape = 'u8[32768]{0}', space=vmem, size = 0x8000, scoped, tag = 'input window, operand 5, single buffered']
    #allocation11 [shape = 'u8[16384]{0}', space=vmem, size = 0x4000, scoped, tag = 'output window, operand 0']
    %12 = vsyncpa [#allocation6], 0
    %13 = vsyncpa [#allocation9], 0
    %14 = vsyncpa [#allocation7], 0
    %s15 = scalar_lea.sflag [#allocation7], 1
    %16 = vsyncpa %s15, 0
    loop: start=0, step=1, limit=8
    $region2: #{tpu_custom_call.1} parent=1 // loop_pre_header
      _
    $region3: #{tpu_custom_call.1} parent=1 // loop_header
      %s18 = sphi 0, %s22
      %p19 = scmp.ge.s32.totalorder %s18, 8
      %s25 = sphi 0, %s37
      %s26 = sphi 0, %s33
      %s27 = sphi 0, %s25
      %s28 = sphi 0, %s26
      %s29 = sphi 0, %s27
      %s30 = sphi 0, %s28
      %s38 = sphi 0, %s38
      %s40 = sphi 0, %s38
      %s41 = sphi 0, %s40
      %s55 = sphi 0, %s41
      %s59 = sphi 0, %s59
      %s61 = sphi 0, %s59
      %s62 = sphi 0, %s61
      %s76 = sphi 0, %s62
      %s80 = sphi 0, %s80
      %s82 = sphi 0, %s80
      %s83 = sphi 0, %s82
      %s97 = sphi 0, %s83
      %s101 = sphi 0, %s101
      %s103 = sphi 0, %s101
      %s104 = sphi 0, %s103
      %s118 = sphi 0, %s104
      %s122 = sphi 0, %s122
      %s124 = sphi 0, %s122
      %s125 = sphi 0, %s124
      %s139 = sphi 0, %s125
      %s143 = sphi 0, %s143
      %s145 = sphi 0, %s143
      %s146 = sphi 0, %s145
      %s160 = sphi 0, %s146
      %s168 = sphi 0, %s170
      %s171 = sphi 0, %s168
      %s172 = sphi 0, %s171
      %s188 = sphi 0, %s172
    $region4: #{tpu_custom_call.1} parent=1 // loop_header_branch
      %21 = sbr.rel (%p19) target = $region8
    $region5: #{tpu_custom_call.1} parent=1 // loop_body
      %s23 = ssub.s32 %s18, 1
      %s24 = ssub.s32 %s18, 2
      %s31 = sadd.s32 1, %s26
      %p32 = scmp.ge.s32.totalorder %s31, 3
      %s33 = scalar_select %p32, 0, %s31
      %s34 = sadd.s32 1, %s25
      %s35 = scalar_select %p32, %s34, %s25
      %p36 = scmp.ge.s32.totalorder %s35, 2
      %s37 = scalar_select %p36, 0, %s35
      %s39 = sadd.s32 %s38, 1
      %p42 = scmp.eq.s32.totalorder %s18, 5
      %p43 = scmp.ne.s32.totalorder %s38, %s40
      %p44 = scmp.eq.s32.totalorder %s18, 0
      %p45 = por %p43, %p44
      %p46 = scmp.ne.s32.totalorder %s38, %s40
      %p47 = scmp.eq.s32.totalorder %s23, 5
      %p48 = por %p46, %p47
      %p49 = scmp.ne.s32.totalorder %s40, %s41
      %p50 = scmp.eq.s32.totalorder %s23, 0
      %p51 = por %p49, %p50
      %p52 = scmp.ne.s32.totalorder %s40, %s41
      %p53 = scmp.eq.s32.totalorder %s24, 5
      %p54 = por %p52, %p53
      %p56 = scmp.ne.s32.totalorder %s41, %s55
      %p57 = scmp.eq.s32.totalorder %s24, 0
      %p58 = por %p56, %p57
      %s60 = sadd.s32 %s59, 1
      %p63 = scmp.eq.s32.totalorder %s18, 5
      %p64 = scmp.ne.s32.totalorder %s59, %s61
      %p65 = scmp.eq.s32.totalorder %s18, 0
      %p66 = por %p64, %p65
      %p67 = scmp.ne.s32.totalorder %s59, %s61
      %p68 = scmp.eq.s32.totalorder %s23, 5
      %p69 = por %p67, %p68
      %p70 = scmp.ne.s32.totalorder %s61, %s62
      %p71 = scmp.eq.s32.totalorder %s23, 0
      %p72 = por %p70, %p71
      %p73 = scmp.ne.s32.totalorder %s61, %s62
      %p74 = scmp.eq.s32.totalorder %s24, 5
      %p75 = por %p73, %p74
      %p77 = scmp.ne.s32.totalorder %s62, %s76
      %p78 = scmp.eq.s32.totalorder %s24, 0
      %p79 = por %p77, %p78
      %s81 = sadd.s32 %s80, 1
      %p84 = scmp.eq.s32.totalorder %s18, 5
      %p85 = scmp.ne.s32.totalorder %s80, %s82
      %p86 = scmp.eq.s32.totalorder %s18, 0
      %p87 = por %p85, %p86
      %p88 = scmp.ne.s32.totalorder %s80, %s82
      %p89 = scmp.eq.s32.totalorder %s23, 5
      %p90 = por %p88, %p89
      %p91 = scmp.ne.s32.totalorder %s82, %s83
      %p92 = scmp.eq.s32.totalorder %s23, 0
      %p93 = por %p91, %p92
      %p94 = scmp.ne.s32.totalorder %s82, %s83
      %p95 = scmp.eq.s32.totalorder %s24, 5
      %p96 = por %p94, %p95
      %p98 = scmp.ne.s32.totalorder %s83, %s97
      %p99 = scmp.eq.s32.totalorder %s24, 0
      %p100 = por %p98, %p99
      %s102 = sadd.s32 %s101, 1
      %p105 = scmp.eq.s32.totalorder %s18, 5
      %p106 = scmp.ne.s32.totalorder %s101, %s103
      %p107 = scmp.eq.s32.totalorder %s18, 0
      %p108 = por %p106, %p107
      %p109 = scmp.ne.s32.totalorder %s101, %s103
      %p110 = scmp.eq.s32.totalorder %s23, 5
      %p111 = por %p109, %p110
      %p112 = scmp.ne.s32.totalorder %s103, %s104
      %p113 = scmp.eq.s32.totalorder %s23, 0
      %p114 = por %p112, %p113
      %p115 = scmp.ne.s32.totalorder %s103, %s104
      %p116 = scmp.eq.s32.totalorder %s24, 5
      %p117 = por %p115, %p116
      %p119 = scmp.ne.s32.totalorder %s104, %s118
      %p120 = scmp.eq.s32.totalorder %s24, 0
      %p121 = por %p119, %p120
      %s123 = sadd.s32 %s122, 1
      %p126 = scmp.eq.s32.totalorder %s18, 5
      %p127 = scmp.ne.s32.totalorder %s122, %s124
      %p128 = scmp.eq.s32.totalorder %s18, 0
      %p129 = por %p127, %p128
      %p130 = scmp.ne.s32.totalorder %s122, %s124
      %p131 = scmp.eq.s32.totalorder %s23, 5
      %p132 = por %p130, %p131
      %p133 = scmp.ne.s32.totalorder %s124, %s125
      %p134 = scmp.eq.s32.totalorder %s23, 0
      %p135 = por %p133, %p134
      %p136 = scmp.ne.s32.totalorder %s124, %s125
      %p137 = scmp.eq.s32.totalorder %s24, 5
      %p138 = por %p136, %p137
      %p140 = scmp.ne.s32.totalorder %s125, %s139
      %p141 = scmp.eq.s32.totalorder %s24, 0
      %p142 = por %p140, %p141
      %s144 = sadd.s32 %s143, 1
      %p147 = scmp.eq.s32.totalorder %s18, 5
      %p148 = scmp.ne.s32.totalorder %s143, %s145
      %p149 = scmp.eq.s32.totalorder %s18, 0
      %p150 = por %p148, %p149
      %p151 = scmp.ne.s32.totalorder %s143, %s145
      %p152 = scmp.eq.s32.totalorder %s23, 5
      %p153 = por %p151, %p152
      %p154 = scmp.ne.s32.totalorder %s145, %s146
      %p155 = scmp.eq.s32.totalorder %s23, 0
      %p156 = por %p154, %p155
      %p157 = scmp.ne.s32.totalorder %s145, %s146
      %p158 = scmp.eq.s32.totalorder %s24, 5
      %p159 = por %p157, %p158
      %p161 = scmp.ne.s32.totalorder %s146, %s160
      %p162 = scmp.eq.s32.totalorder %s24, 0
      %p163 = por %p161, %p162
      %s164 = ssub.s32 %s25, %s37
      %s165 = ssub.s32 %s26, %s33
      %s166 = sor.u32 %s164, %s165
      %p167 = scmp.eq.s32.totalorder %s166, 0
      %s169 = sadd.s32 %s168, 1
      %s170 = scalar_select %p167, %s168, %s169
      %p173 = pneg %p167
      %p174 = scmp.eq.s32.totalorder %s18, 5
      %p175 = por %p173, %p174
      %p176 = scmp.ne.s32.totalorder %s168, %s171
      %p177 = scmp.eq.s32.totalorder %s18, 0
      %p178 = por %p176, %p177
      %p179 = scmp.ne.s32.totalorder %s168, %s171
      %p180 = scmp.eq.s32.totalorder %s23, 5
      %p181 = por %p179, %p180
      %p182 = scmp.ne.s32.totalorder %s171, %s172
      %p183 = scmp.eq.s32.totalorder %s23, 0
      %p184 = por %p182, %p183
      %p185 = scmp.ne.s32.totalorder %s171, %s172
      %p186 = scmp.eq.s32.totalorder %s24, 5
      %p187 = por %p185, %p186
      %p189 = scmp.ne.s32.totalorder %s172, %s188
      %p190 = scmp.eq.s32.totalorder %s24, 0
      %p191 = por %p189, %p190
      %p192 = scmp.le.s32.totalorder 1, %s18
      %p193 = scmp.lt.s32.totalorder %s18, 7
      %p194 = pnand %p192, %p193
      %p195 = pneg %p194
      // Predicated region
      $region9: #{tpu_custom_call.1} parent=5 // pred_check
        _
      $region10: #{tpu_custom_call.1} parent=5 // pred_check_branch
        %197 = sbr.rel (%p194) target = $region12
      $region11: #{tpu_custom_call.1} parent=5 // pred_region
        %s198 = ssub.s32 %s18, 1
        // Predicated region
        $region13: #{tpu_custom_call.1} parent=11 // pred_check
          %p199 = pneg %p51
        $region14: #{tpu_custom_call.1} parent=11 // pred_check_branch
          %201 = sbr.rel (%p199) target = $region16
        $region15: #{tpu_custom_call.1} parent=11 // pred_region
          %s203 = ssub.s32 5120, 5120
          %204 = vsyncadd [#allocation6], %s203
          %s205 = sshll.u32 [#allocation5], 4
          %s206 = int_to_ptr.vmem [resolvable:$true] %s205
          %211 = dma.hbm_to_vmem [thread:$0]  %s1, 5120, %s206, [#allocation6], 64, 64, 4
        $region16: #{tpu_custom_call.1} parent=11 // pred_fallthru
          _
        // Predicated region
        $region17: #{tpu_custom_call.1} parent=11 // pred_check
          %p212 = pneg %p72
        $region18: #{tpu_custom_call.1} parent=11 // pred_check_branch
          %214 = sbr.rel (%p212) target = $region20
        $region19: #{tpu_custom_call.1} parent=11 // pred_region
          _
        $region20: #{tpu_custom_call.1} parent=11 // pred_fallthru
          _
        // Predicated region
        $region21: #{tpu_custom_call.1} parent=11 // pred_check
          %p215 = pneg %p93
        $region22: #{tpu_custom_call.1} parent=11 // pred_check_branch
          %217 = sbr.rel (%p215) target = $region24
        $region23: #{tpu_custom_call.1} parent=11 // pred_region
          %s219 = ssub.s32 5120, 5120
          %220 = vsyncadd [#allocation9], %s219
          %s221 = sshll.u32 [#allocation8], 4
          %s222 = int_to_ptr.vmem [resolvable:$true] %s221
          %227 = dma.hbm_to_vmem [thread:$0]  %s3, 5120, %s222, [#allocation9], 64, 64, 4
        $region24: #{tpu_custom_call.1} parent=11 // pred_fallthru
          _
        // Predicated region
        $region25: #{tpu_custom_call.1} parent=11 // pred_check
          %p228 = pneg %p114
        $region26: #{tpu_custom_call.1} parent=11 // pred_check_branch
          %230 = sbr.rel (%p228) target = $region28
        $region27: #{tpu_custom_call.1} parent=11 // pred_region
          _
        $region28: #{tpu_custom_call.1} parent=11 // pred_fallthru
          _
        // Predicated region
        $region29: #{tpu_custom_call.1} parent=11 // pred_check
          %p231 = pneg %p135
        $region30: #{tpu_custom_call.1} parent=11 // pred_check_branch
          %233 = sbr.rel (%p231) target = $region32
        $region31: #{tpu_custom_call.1} parent=11 // pred_region
          %s235 = ssub.s32 1024, 1024
          %236 = vsyncadd [#allocation9], %s235
          %s237 = sshll.u32 [#allocation10], 4
          %s238 = int_to_ptr.vmem [resolvable:$true] %s237
          %243 = dma.hbm_to_vmem [thread:$0]  %s5, 1024, %s238, [#allocation9], 64, 64, 4
        $region32: #{tpu_custom_call.1} parent=11 // pred_fallthru
          _
        // Predicated region
        $region33: #{tpu_custom_call.1} parent=11 // pred_check
          %p244 = pneg %p156
        $region34: #{tpu_custom_call.1} parent=11 // pred_check_branch
          %246 = sbr.rel (%p244) target = $region36
        $region35: #{tpu_custom_call.1} parent=11 // pred_region
          _
        $region36: #{tpu_custom_call.1} parent=11 // pred_fallthru
          _
      $region12: #{tpu_custom_call.1} parent=5 // pred_fallthru
        _
      %p247 = scmp.lt.s32.totalorder %s18, 6
      // Predicated region
      $region37: #{tpu_custom_call.1} parent=5 // pred_check
        %p248 = pneg %p247
      $region38: #{tpu_custom_call.1} parent=5 // pred_check_branch
        %250 = sbr.rel (%p248) target = $region40
      $region39: #{tpu_custom_call.1} parent=5 // pred_region
        _
      $region40: #{tpu_custom_call.1} parent=5 // pred_fallthru
        _
      %p251 = scmp.le.s32.totalorder 1, %s18
      %p252 = scmp.lt.s32.totalorder %s18, 7
      %p253 = pnand %p251, %p252
      %p254 = pneg %p253
      // Predicated region
      $region41: #{tpu_custom_call.1} parent=5 // pred_check
        _
      $region42: #{tpu_custom_call.1} parent=5 // pred_check_branch
        %256 = sbr.rel (%p253) target = $region44
      $region43: #{tpu_custom_call.1} parent=5 // pred_region
        %s257 = ssub.s32 %s18, 1
        // Predicated region
        $region45: #{tpu_custom_call.1} parent=43 // pred_check
          %p258 = pneg %p51
        $region46: #{tpu_custom_call.1} parent=43 // pred_check_branch
          %260 = sbr.rel (%p258) target = $region48
        $region47: #{tpu_custom_call.1} parent=43 // pred_region
          %261 = dma.done [#allocation6], 5120
        $region48: #{tpu_custom_call.1} parent=43 // pred_fallthru
          _
        // Predicated region
        $region49: #{tpu_custom_call.1} parent=43 // pred_check
          %p262 = pneg %p93
        $region50: #{tpu_custom_call.1} parent=43 // pred_check_branch
          %264 = sbr.rel (%p262) target = $region52
        $region51: #{tpu_custom_call.1} parent=43 // pred_region
          %265 = dma.done [#allocation9], 5120
        $region52: #{tpu_custom_call.1} parent=43 // pred_fallthru
          _
        // Predicated region
        $region53: #{tpu_custom_call.1} parent=43 // pred_check
          %p266 = pneg %p135
        $region54: #{tpu_custom_call.1} parent=43 // pred_check_branch
          %268 = sbr.rel (%p266) target = $region56
        $region55: #{tpu_custom_call.1} parent=43 // pred_region
          %269 = dma.done [#allocation9], 1024
        $region56: #{tpu_custom_call.1} parent=43 // pred_fallthru
          _
        %p270 = pneg %p51
        %p271 = pneg %p48
        %p272 = pneg %p72
        %p273 = pneg %p69
        %p274 = pneg %p93
        %p275 = pneg %p90
        %p276 = pneg %p114
        %p277 = pneg %p111
        %p278 = pneg %p135
        %p279 = pneg %p132
        %p280 = pneg %p156
        %p281 = pneg %p153
        %p282 = pneg %p184
        %p283 = pneg %p181
        %s284 = sand.u32 %s171, 1
        %s285 = scalar_lea.sflag [#allocation7], %s284
        %s286 = sand.u32 %s171, 1
        %s287 = smul.addr %s286, 16
        %s288 = scalar_lea.vmem [#allocation11], %s287
        %s289 = smul.u32 4, %s28
        %p291 = scmp.lt.s32.totalorder %s28, 0
        %s292 = ssub.s32 0, %s28
        %s293 = scalar_select %p291, %s292, %s28
        %s294 = sand.u32 %s293, 1
        %s295 = ssub.s32 0, %s294
        %s296 = scalar_select %p291, %s295, %s294
        %p297 = scmp.ne.s32.totalorder %s296, 0
        %p298 = scmp.lt.s32.totalorder %s296, 0
        %p299 = pnand %p298, %p297
        %p300 = pneg %p299
        %s301 = sadd.s32 %s296, 2
        %s302 = scalar_select %p300, %s301, %s296
        %p303 = scmp.eq.s32.totalorder %s28, 0
        // Predicated region
        $region57: #{tpu_custom_call.1} parent=43 // pred_check
          %p304 = pneg %p303
        $region58: #{tpu_custom_call.1} parent=43 // pred_check_branch
          %306 = sbr.rel (%p304) target = $region60
        $region59: #{tpu_custom_call.1} parent=43 // pred_region
          %s307 = smul.u32 %s27, 13
          %s308 = sadd.s32 0, %s307
          %s309 = smul.addr %s308, 64
          %s310 = scalar_lea.hbm %s0, %s309
          // Predicated region
          $region61: #{tpu_custom_call.1} parent=59 // pred_check
            _
          $region62: #{tpu_custom_call.1} parent=59 // pred_check_branch
            %312 = sbr.rel target = $region64
          $region63: #{tpu_custom_call.1} parent=59 // pred_region
            %313 = sst [smem:[#allocation14]] [#allocation13]
            %314 = sst [smem:[#allocation15]] [#allocation12]
          $region64: #{tpu_custom_call.1} parent=59 // pred_fallthru
            _
          %316 = shalt.err (0)
          %s318 = sshll.u32 [#allocation2], 4
          %s319 = int_to_ptr.vmem [resolvable:$true] %s318
          %321 = dma.hbm_to_vmem [thread:$0]  %s310, 320, %s319, [#allocation4]
        $region60: #{tpu_custom_call.1} parent=43 // pred_fallthru
          _
        %s322 = smul.u32 %s302, 5
        %s323 = smul.addr %s322, 4
        %s324 = scalar_lea.vmem [#allocation2], %s323
        %s325 = scalar_lea.sflag [#allocation4], %s302
        %s326 = smul.u32 4, 5
        %s327 = smul.u32 %s326, 1
        %s328 = sshll.u32 %s327, 4
        %329 = dma.done %s325, %s328
        %s330 = sadd.s32 %s28, 1
        %p331 = scmp.lt.s32.totalorder %s330, 3
        // Predicated region
        $region65: #{tpu_custom_call.1} parent=43 // pred_check
          %p332 = pneg %p331
        $region66: #{tpu_custom_call.1} parent=43 // pred_check_branch
          %334 = sbr.rel (%p332) target = $region68
        $region67: #{tpu_custom_call.1} parent=43 // pred_region
          %s335 = ssub.s32 1, %s302
          %s336 = smul.u32 %s330, 32
          %s337 = sshra.s32 %s336, 3
          %s338 = sand.u32 %s336, 7
          %s339 = smul.u32 %s27, 13
          %s340 = sadd.s32 %s337, %s339
          %s341 = smul.addr %s340, 64
          %s342 = scalar_lea.hbm %s0, %s341
          %s343 = smul.u32 %s335, 5
          %s344 = smul.addr %s343, 4
          %s345 = scalar_lea.vmem [#allocation2], %s344
          %s346 = scalar_lea.sflag [#allocation4], %s335
          // Predicated region
          $region69: #{tpu_custom_call.1} parent=67 // pred_check
            _
          $region70: #{tpu_custom_call.1} parent=67 // pred_check_branch
            %348 = sbr.rel target = $region72
          $region71: #{tpu_custom_call.1} parent=67 // pred_region
            %349 = sst [smem:[#allocation14]] [#allocation17]
            %350 = sst [smem:[#allocation15]] [#allocation16]
          $region72: #{tpu_custom_call.1} parent=67 // pred_fallthru
            _
          %352 = shalt.err (0)
          %s354 = sshll.u32 %s345, 4
          %s355 = int_to_ptr.vmem [resolvable:$true] %s354
          %357 = dma.hbm_to_vmem [thread:$0]  %s342, 320, %s355, %s346
        $region68: #{tpu_custom_call.1} parent=43 // pred_fallthru
          _
        %v358 = vld [vmem:[%s324] sm:$0xf]
        %v359 = vld [vmem:[%s324 + $0x4] sm:$0xf]
        %v360 = vld [vmem:[%s324 + $0x8] sm:$0xf]
        %v361 = vld [vmem:[%s324 + $0xc] sm:$0xf]
        %v362 = vld [vmem:[%s324 + $0x10] sm:$0x3]
        %v363 = vld [vmem:[#allocation5] sm:$0xf]
        %v364 = vld [vmem:[#allocation5 + $0x4] sm:$0xf]
        %v365 = vld [vmem:[#allocation5 + $0x8] sm:$0xf]
        %v366 = vld [vmem:[#allocation5 + $0xc] sm:$0xf]
        %v367 = vld [vmem:[#allocation5 + $0x10] sm:$0xf]
        %v368 = vld [vmem:[#allocation5 + $0x14] sm:$0xf]
        %v369 = vld [vmem:[#allocation5 + $0x18] sm:$0xf]
        %v370 = vld [vmem:[#allocation5 + $0x1c] sm:$0xf]
        %v371 = vld [vmem:[#allocation5 + $0x20] sm:$0xf]
        %v372 = vld [vmem:[#allocation5 + $0x24] sm:$0xf]
        %v373 = vld [vmem:[#allocation5 + $0x28] sm:$0xf]
        %v374 = vld [vmem:[#allocation5 + $0x2c] sm:$0xf]
        %v375 = vld [vmem:[#allocation5 + $0x30] sm:$0xf]
        %v376 = vld [vmem:[#allocation5 + $0x34] sm:$0xf]
        %v377 = vld [vmem:[#allocation5 + $0x38] sm:$0xf]
        %v378 = vld [vmem:[#allocation5 + $0x3c] sm:$0xf]
        %v379 = vld [vmem:[%s324 + $0x10] sm:$0x7]
        %s380 = scalar_lea.vmem [#allocation5], 64
        %v381 = vld [vmem:[%s380] sm:$0xf]
        %v382 = vld [vmem:[%s380 + $0x4] sm:$0xf]
        %v383 = vld [vmem:[%s380 + $0x8] sm:$0xf]
        %v384 = vld [vmem:[%s380 + $0xc] sm:$0xf]
        %v385 = vld [vmem:[%s380 + $0x10] sm:$0xf]
        %v386 = vld [vmem:[%s380 + $0x14] sm:$0xf]
        %v387 = vld [vmem:[%s380 + $0x18] sm:$0xf]
        %v388 = vld [vmem:[%s380 + $0x1c] sm:$0xf]
        %v389 = vld [vmem:[%s380 + $0x20] sm:$0xf]
        %v390 = vld [vmem:[%s380 + $0x24] sm:$0xf]
        %v391 = vld [vmem:[%s380 + $0x28] sm:$0xf]
        %v392 = vld [vmem:[%s380 + $0x2c] sm:$0xf]
        %v393 = vld [vmem:[%s380 + $0x30] sm:$0xf]
        %v394 = vld [vmem:[%s380 + $0x34] sm:$0xf]
        %v395 = vld [vmem:[%s380 + $0x38] sm:$0xf]
        %v396 = vld [vmem:[%s380 + $0x3c] sm:$0xf]
        %v402 = vunpack.c.l.b16 %v358
        %v403 = vunpack.c.l.b16 %v359
        %v404 = vunpack.c.l.b16 %v360
        %v405 = vunpack.c.l.b16 %v361
        %v406 = vunpack.c.l.b16 %v379
        %v407 = vpack.c.b16 %v403, %v402
        %v408 = vpack.c.b16 %v405, %v404
        %v409 = vpack.c.b16 %v406, %v406
        %vm410 = vsmask.f32 7424
        %v412 = vshrl.u32 %v407, 16
        %v414 = vshll.u32 %v407, 16
        %v416 = vrot.slane %v414, 1
        %v417 = vor.u32 %v412, %v416
        %v419 = vshll.u32 %v408, 16
        %v421 = vrot.slane %v419, 1
        %v422 = vsel %vm410, %v417, %v421
        %v423 = vshrl.u32 %v408, 16
        %v425 = vor.u32 %v423, %v421
        %v427 = vshll.u32 %v409, 16
        %v429 = vrot.slane %v427, 1
        %v430 = vsel %vm410, %v425, %v429
        %v431 = vshrl.u32 %v409, 16
        %v433 = vor.u32 %v431, %v429
        %v453 = vunpack.c.l.b16 %v381
        %v454 = vunpack.c.l.b16 %v382
        %v455 = vunpack.c.l.b16 %v383
        %v456 = vunpack.c.l.b16 %v384
        %v457 = vunpack.c.l.b16 %v385
        %v458 = vunpack.c.l.b16 %v386
        %v459 = vunpack.c.l.b16 %v387
        %v460 = vunpack.c.l.b16 %v388
        %v461 = vunpack.c.l.b16 %v389
        %v462 = vunpack.c.l.b16 %v390
        %v463 = vunpack.c.l.b16 %v391
        %v464 = vunpack.c.l.b16 %v392
        %v465 = vunpack.c.l.b16 %v393
        %v466 = vunpack.c.l.b16 %v394
        %v467 = vunpack.c.l.b16 %v395
        %v468 = vunpack.c.l.b16 %v396
        %v469 = vpack.c.b16 %v454, %v453
        %v470 = vpack.c.b16 %v456, %v455
        %v471 = vpack.c.b16 %v458, %v457
        %v472 = vpack.c.b16 %v460, %v459
        %v473 = vpack.c.b16 %v462, %v461
        %v474 = vpack.c.b16 %v464, %v463
        %v475 = vpack.c.b16 %v466, %v465
        %v476 = vpack.c.b16 %v468, %v467
        %485 = vmatprep.subr.bf16.mxu0 0
        %486 = vmatpush1.bf16.msra.mxu0 %v469
        %487 = vmatprep.subr.bf16.mxu0 0
        %488 = vmatpush1.bf16.msra.mxu0 %v470
        %489 = vmatprep.subr.bf16.mxu0 0
        %490 = vmatpush1.bf16.msra.mxu0 %v471
        %491 = vmatprep.subr.bf16.mxu0 0
        %492 = vmatpush1.bf16.msra.mxu0 %v472
        %493 = vmatprep.subr.bf16.mxu0 0
        %494 = vmatpush1.bf16.msra.mxu0 %v473
        %495 = vmatprep.subr.bf16.mxu0 0
        %496 = vmatpush1.bf16.msra.mxu0 %v474
        %497 = vmatprep.subr.bf16.mxu0 0
        %498 = vmatpush1.bf16.msra.mxu0 %v475
        %499 = vmatprep.subr.bf16.mxu0 0
        %500 = vmatpush1.bf16.msra.mxu0 %v476
        %501 = vmatprep.subr.bf16.mxu0 0
        %502 = vmatpush1.bf16.msra.mxu0 0
        %503 = vmatprep.subr.bf16.mxu0 0
        %504 = vmatpush1.bf16.msra.mxu0 0
        %505 = vmatprep.subr.bf16.mxu0 0
        %506 = vmatpush1.bf16.msra.mxu0 0
        %507 = vmatprep.subr.bf16.mxu0 0
        %508 = vmatpush1.bf16.msra.mxu0 0
        %509 = vmatprep.subr.bf16.mxu0 0
        %510 = vmatpush1.bf16.msra.mxu0 0
        %511 = vmatprep.subr.bf16.mxu0 0
        %512 = vmatpush1.bf16.msra.mxu0 0
        %513 = vmatprep.subr.bf16.mxu0 0
        %514 = vmatpush1.bf16.msra.mxu0 0
        %515 = vmatprep.subr.bf16.mxu0 0
        %516 = vmatpush1.bf16.msra.mxu0 0
        %517 = vmatprep.mubr.bf16.mxu0 0
        %518 = vmatmul.mubr.bf16.gmra.mrb[0].mxu0 %v422
        %v519 = vpop.f32.mrb[0].mxu0
        %v520 = vadd.f32 0.0, %v519
        %v521 = vpop.f32.mrb[0].mxu0
        %v522 = vpop.f32.mrb[0].mxu0
        %v523 = vadd.f32 0.0, %v522
        %v524 = vpop.f32.mrb[0].mxu0
        %525 = vmatprep.mubr.bf16.mxu0 0
        %526 = vmatmul.mubr.bf16.gmra.mrb[0].mxu0 %v430
        %v527 = vpop.f32.mrb[0].mxu0
        %v528 = vadd.f32 0.0, %v527
        %v529 = vpop.f32.mrb[0].mxu0
        %v530 = vpop.f32.mrb[0].mxu0
        %v531 = vadd.f32 0.0, %v530
        %v532 = vpop.f32.mrb[0].mxu0
        %533 = vmatprep.mubr.bf16.mxu0 0
        %534 = vmatmul.mubr.bf16.gmra.mrb[0].mxu0 %v433
        %v535 = vpop.f32.mrb[0].mxu0
        %v536 = vadd.f32 0.0, %v535
        %v537 = vpop.f32.mrb[0].mxu0
        %v538 = vpop.f32.mrb[0].mxu0
        %v539 = vpop.f32.mrb[0].mxu0
        %540 = vdwg.mxu0
        %v542 = vunpack.c.l.b16 %v362
        %v543 = vpack.c.b16 %v542, %v542
        %v563 = vunpack.c.l.b16 %v363
        %v564 = vunpack.c.l.b16 %v364
        %v565 = vunpack.c.l.b16 %v365
        %v566 = vunpack.c.l.b16 %v366
        %v567 = vunpack.c.l.b16 %v367
        %v568 = vunpack.c.l.b16 %v368
        %v569 = vunpack.c.l.b16 %v369
        %v570 = vunpack.c.l.b16 %v370
        %v571 = vunpack.c.l.b16 %v371
        %v572 = vunpack.c.l.b16 %v372
        %v573 = vunpack.c.l.b16 %v373
        %v574 = vunpack.c.l.b16 %v374
        %v575 = vunpack.c.l.b16 %v375
        %v576 = vunpack.c.l.b16 %v376
        %v577 = vunpack.c.l.b16 %v377
        %v578 = vunpack.c.l.b16 %v378
        %v579 = vpack.c.b16 %v564, %v563
        %v580 = vpack.c.b16 %v566, %v565
        %v581 = vpack.c.b16 %v568, %v567
        %v582 = vpack.c.b16 %v570, %v569
        %v583 = vpack.c.b16 %v572, %v571
        %v584 = vpack.c.b16 %v574, %v573
        %v585 = vpack.c.b16 %v576, %v575
        %v586 = vpack.c.b16 %v578, %v577
        %595 = vmatprep.subr.bf16.mxu0 0
        %596 = vmatpush1.bf16.msra.mxu0 %v579
        %597 = vmatprep.subr.bf16.mxu0 0
        %598 = vmatpush1.bf16.msra.mxu0 %v580
        %599 = vmatprep.subr.bf16.mxu0 0
        %600 = vmatpush1.bf16.msra.mxu0 %v581
        %601 = vmatprep.subr.bf16.mxu0 0
        %602 = vmatpush1.bf16.msra.mxu0 %v582
        %603 = vmatprep.subr.bf16.mxu0 0
        %604 = vmatpush1.bf16.msra.mxu0 %v583
        %605 = vmatprep.subr.bf16.mxu0 0
        %606 = vmatpush1.bf16.msra.mxu0 %v584
        %607 = vmatprep.subr.bf16.mxu0 0
        %608 = vmatpush1.bf16.msra.mxu0 %v585
        %609 = vmatprep.subr.bf16.mxu0 0
        %610 = vmatpush1.bf16.msra.mxu0 %v586
        %611 = vmatprep.subr.bf16.mxu0 0
        %612 = vmatpush1.bf16.msra.mxu0 0
        %613 = vmatprep.subr.bf16.mxu0 0
        %614 = vmatpush1.bf16.msra.mxu0 0
        %615 = vmatprep.subr.bf16.mxu0 0
        %616 = vmatpush1.bf16.msra.mxu0 0
        %617 = vmatprep.subr.bf16.mxu0 0
        %618 = vmatpush1.bf16.msra.mxu0 0
        %619 = vmatprep.subr.bf16.mxu0 0
        %620 = vmatpush1.bf16.msra.mxu0 0
        %621 = vmatprep.subr.bf16.mxu0 0
        %622 = vmatpush1.bf16.msra.mxu0 0
        %623 = vmatprep.subr.bf16.mxu0 0
        %624 = vmatpush1.bf16.msra.mxu0 0
        %625 = vmatprep.subr.bf16.mxu0 0
        %626 = vmatpush1.bf16.msra.mxu0 0
        %627 = vmatprep.mubr.bf16.mxu0 0
        %628 = vmatmul.mubr.bf16.gmra.mrb[0].mxu0 %v407
        %v629 = vpop.f32.mrb[0].mxu0
        %v630 = vadd.f32 %v520, %v629
        %v631 = vpop.f32.mrb[0].mxu0
        %v632 = vpop.f32.mrb[0].mxu0
        %v633 = vadd.f32 %v523, %v632
        %v634 = vpop.f32.mrb[0].mxu0
        %635 = vmatprep.mubr.bf16.mxu0 0
        %636 = vmatmul.mubr.bf16.gmra.mrb[0].mxu0 %v408
        %v637 = vpop.f32.mrb[0].mxu0
        %v638 = vadd.f32 %v528, %v637
        %v639 = vpop.f32.mrb[0].mxu0
        %v640 = vpop.f32.mrb[0].mxu0
        %v641 = vadd.f32 %v531, %v640
        %v642 = vpop.f32.mrb[0].mxu0
        %643 = vmatprep.mubr.bf16.mxu0 0
        %644 = vmatmul.mubr.bf16.gmra.mrb[0].mxu0 %v543
        %v645 = vpop.f32.mrb[0].mxu0
        %v646 = vadd.f32 %v536, %v645
        %v647 = vpop.f32.mrb[0].mxu0
        %v648 = vpop.f32.mrb[0].mxu0
        %v649 = vpop.f32.mrb[0].mxu0
        %650 = vdwg.mxu0
        %v651 = vld [vmem:[%s324] sm:$0xe]
        %s652 = scalar_lea.vmem [#allocation5], 128
        %v653 = vld [vmem:[%s652] sm:$0xf]
        %v654 = vld [vmem:[%s652 + $0x4] sm:$0xf]
        %v655 = vld [vmem:[%s652 + $0x8] sm:$0xf]
        %v656 = vld [vmem:[%s652 + $0xc] sm:$0xf]
        %v657 = vld [vmem:[%s652 + $0x10] sm:$0xf]
        %v658 = vld [vmem:[%s652 + $0x14] sm:$0xf]
        %v659 = vld [vmem:[%s652 + $0x18] sm:$0xf]
        %v660 = vld [vmem:[%s652 + $0x1c] sm:$0xf]
        %v661 = vld [vmem:[%s652 + $0x20] sm:$0xf]
        %v662 = vld [vmem:[%s652 + $0x24] sm:$0xf]
        %v663 = vld [vmem:[%s652 + $0x28] sm:$0xf]
        %v664 = vld [vmem:[%s652 + $0x2c] sm:$0xf]
        %v665 = vld [vmem:[%s652 + $0x30] sm:$0xf]
        %v666 = vld [vmem:[%s652 + $0x34] sm:$0xf]
        %v667 = vld [vmem:[%s652 + $0x38] sm:$0xf]
        %v668 = vld [vmem:[%s652 + $0x3c] sm:$0xf]
        %v670 = vunpack.c.l.b16 %v651
        %v671 = vpack.c.b16 %v403, %v670
        %vm672 = vcmask 1046528
        %v673 = vrot.slane %v671, 1
        %v674 = vrot.slane %v408, 1
        %v675 = vsel %vm672, %v673, %v674
        %v676 = vrot.slane %v409, 1
        %v677 = vsel %vm672, %v674, %v676
        %v697 = vunpack.c.l.b16 %v653
        %v698 = vunpack.c.l.b16 %v654
        %v699 = vunpack.c.l.b16 %v655
        %v700 = vunpack.c.l.b16 %v656
        %v701 = vunpack.c.l.b16 %v657
        %v702 = vunpack.c.l.b16 %v658
        %v703 = vunpack.c.l.b16 %v659
        %v704 = vunpack.c.l.b16 %v660
        %v705 = vunpack.c.l.b16 %v661
        %v706 = vunpack.c.l.b16 %v662
        %v707 = vunpack.c.l.b16 %v663
        %v708 = vunpack.c.l.b16 %v664
        %v709 = vunpack.c.l.b16 %v665
        %v710 = vunpack.c.l.b16 %v666
        %v711 = vunpack.c.l.b16 %v667
        %v712 = vunpack.c.l.b16 %v668
        %v713 = vpack.c.b16 %v698, %v697
        %v714 = vpack.c.b16 %v700, %v699
        %v715 = vpack.c.b16 %v702, %v701
        %v716 = vpack.c.b16 %v704, %v703
        %v717 = vpack.c.b16 %v706, %v705
        %v718 = vpack.c.b16 %v708, %v707
        %v719 = vpack.c.b16 %v710, %v709
        %v720 = vpack.c.b16 %v712, %v711
        %729 = vmatprep.subr.bf16.mxu0 0
        %730 = vmatpush1.bf16.msra.mxu0 %v713
        %731 = vmatprep.subr.bf16.mxu0 0
        %732 = vmatpush1.bf16.msra.mxu0 %v714
        %733 = vmatprep.subr.bf16.mxu0 0
        %734 = vmatpush1.bf16.msra.mxu0 %v715
        %735 = vmatprep.subr.bf16.mxu0 0
        %736 = vmatpush1.bf16.msra.mxu0 %v716
        %737 = vmatprep.subr.bf16.mxu0 0
        %738 = vmatpush1.bf16.msra.mxu0 %v717
        %739 = vmatprep.subr.bf16.mxu0 0
        %740 = vmatpush1.bf16.msra.mxu0 %v718
        %741 = vmatprep.subr.bf16.mxu0 0
        %742 = vmatpush1.bf16.msra.mxu0 %v719
        %743 = vmatprep.subr.bf16.mxu0 0
        %744 = vmatpush1.bf16.msra.mxu0 %v720
        %745 = vmatprep.subr.bf16.mxu0 0
        %746 = vmatpush1.bf16.msra.mxu0 0
        %747 = vmatprep.subr.bf16.mxu0 0
        %748 = vmatpush1.bf16.msra.mxu0 0
        %749 = vmatprep.subr.bf16.mxu0 0
        %750 = vmatpush1.bf16.msra.mxu0 0
        %751 = vmatprep.subr.bf16.mxu0 0
        %752 = vmatpush1.bf16.msra.mxu0 0
        %753 = vmatprep.subr.bf16.mxu0 0
        %754 = vmatpush1.bf16.msra.mxu0 0
        %755 = vmatprep.subr.bf16.mxu0 0
        %756 = vmatpush1.bf16.msra.mxu0 0
        %757 = vmatprep.subr.bf16.mxu0 0
        %758 = vmatpush1.bf16.msra.mxu0 0
        %759 = vmatprep.subr.bf16.mxu0 0
        %760 = vmatpush1.bf16.msra.mxu0 0
        %761 = vmatprep.mubr.bf16.mxu0 0
        %762 = vmatmul.mubr.bf16.gmra.mrb[0].mxu0 %v675
        %v763 = vpop.f32.mrb[0].mxu0
        %v764 = vadd.f32 0.0, %v763
        %v765 = vpop.f32.mrb[0].mxu0
        %v766 = vpop.f32.mrb[0].mxu0
        %v767 = vadd.f32 0.0, %v766
        %v768 = vpop.f32.mrb[0].mxu0
        %769 = vmatprep.mubr.bf16.mxu0 0
        %770 = vmatmul.mubr.bf16.gmra.mrb[0].mxu0 %v677
        %v771 = vpop.f32.mrb[0].mxu0
        %v772 = vadd.f32 0.0, %v771
        %v773 = vpop.f32.mrb[0].mxu0
        %v774 = vpop.f32.mrb[0].mxu0
        %v775 = vadd.f32 0.0, %v774
        %v776 = vpop.f32.mrb[0].mxu0
        %777 = vmatprep.mubr.bf16.mxu0 0
        %778 = vmatmul.mubr.bf16.gmra.mrb[0].mxu0 %v676
        %v779 = vpop.f32.mrb[0].mxu0
        %v780 = vadd.f32 0.0, %v779
        %v781 = vpop.f32.mrb[0].mxu0
        %v782 = vpop.f32.mrb[0].mxu0
        %v783 = vpop.f32.mrb[0].mxu0
        %784 = vdwg.mxu0
        %v785 = vadd.f32 %v630, %v764
        %v786 = vadd.f32 %v633, %v767
        %v787 = vadd.f32 %v638, %v772
        %v788 = vadd.f32 %v641, %v775
        %v789 = vadd.f32 %v646, %v780
        %v790 = vld [vmem:[%s324 + $0x10] sm:$0xf]
        %s791 = scalar_lea.vmem [#allocation5], 192
        %v792 = vld [vmem:[%s791] sm:$0xf]
        %v793 = vld [vmem:[%s791 + $0x4] sm:$0xf]
        %v794 = vld [vmem:[%s791 + $0x8] sm:$0xf]
        %v795 = vld [vmem:[%s791 + $0xc] sm:$0xf]
        %v796 = vld [vmem:[%s791 + $0x10] sm:$0xf]
        %v797 = vld [vmem:[%s791 + $0x14] sm:$0xf]
        %v798 = vld [vmem:[%s791 + $0x18] sm:$0xf]
        %v799 = vld [vmem:[%s791 + $0x1c] sm:$0xf]
        %v800 = vld [vmem:[%s791 + $0x20] sm:$0xf]
        %v801 = vld [vmem:[%s791 + $0x24] sm:$0xf]
        %v802 = vld [vmem:[%s791 + $0x28] sm:$0xf]
        %v803 = vld [vmem:[%s791 + $0x2c] sm:$0xf]
        %v804 = vld [vmem:[%s791 + $0x30] sm:$0xf]
        %v805 = vld [vmem:[%s791 + $0x34] sm:$0xf]
        %v806 = vld [vmem:[%s791 + $0x38] sm:$0xf]
        %v807 = vld [vmem:[%s791 + $0x3c] sm:$0xf]
        %v809 = vunpack.c.l.b16 %v790
        %v810 = vpack.c.b16 %v809, %v809
        %vm811 = vsmask.f32 6400
        %v813 = vshrl.u32 %v671, 16
        %v815 = vrot.slane %v813, 1
        %v816 = vshll.u32 %v671, 16
        %v818 = vrot.slane %v816, 2
        %v819 = vor.u32 %v815, %v818
        %v820 = vrot.slane %v423, 1
        %v821 = vrot.slane %v419, 2
        %v822 = vor.u32 %v820, %v821
        %v823 = vsel %vm811, %v819, %v822
        %v825 = vshrl.u32 %v810, 16
        %v827 = vrot.slane %v825, 1
        %v828 = vshll.u32 %v810, 16
        %v830 = vrot.slane %v828, 2
        %v831 = vor.u32 %v827, %v830
        %v832 = vsel %vm811, %v822, %v831
        %v852 = vunpack.c.l.b16 %v792
        %v853 = vunpack.c.l.b16 %v793
        %v854 = vunpack.c.l.b16 %v794
        %v855 = vunpack.c.l.b16 %v795
        %v856 = vunpack.c.l.b16 %v796
        %v857 = vunpack.c.l.b16 %v797
        %v858 = vunpack.c.l.b16 %v798
        %v859 = vunpack.c.l.b16 %v799
        %v860 = vunpack.c.l.b16 %v800
        %v861 = vunpack.c.l.b16 %v801
        %v862 = vunpack.c.l.b16 %v802
        %v863 = vunpack.c.l.b16 %v803
        %v864 = vunpack.c.l.b16 %v804
        %v865 = vunpack.c.l.b16 %v805
        %v866 = vunpack.c.l.b16 %v806
        %v867 = vunpack.c.l.b16 %v807
        %v868 = vpack.c.b16 %v853, %v852
        %v869 = vpack.c.b16 %v855, %v854
        %v870 = vpack.c.b16 %v857, %v856
        %v871 = vpack.c.b16 %v859, %v858
        %v872 = vpack.c.b16 %v861, %v860
        %v873 = vpack.c.b16 %v863, %v862
        %v874 = vpack.c.b16 %v865, %v864
        %v875 = vpack.c.b16 %v867, %v866
        %884 = vmatprep.subr.bf16.mxu0 0
        %885 = vmatpush1.bf16.msra.mxu0 %v868
        %886 = vmatprep.subr.bf16.mxu0 0
        %887 = vmatpush1.bf16.msra.mxu0 %v869
        %888 = vmatprep.subr.bf16.mxu0 0
        %889 = vmatpush1.bf16.msra.mxu0 %v870
        %890 = vmatprep.subr.bf16.mxu0 0
        %891 = vmatpush1.bf16.msra.mxu0 %v871
        %892 = vmatprep.subr.bf16.mxu0 0
        %893 = vmatpush1.bf16.msra.mxu0 %v872
        %894 = vmatprep.subr.bf16.mxu0 0
        %895 = vmatpush1.bf16.msra.mxu0 %v873
        %896 = vmatprep.subr.bf16.mxu0 0
        %897 = vmatpush1.bf16.msra.mxu0 %v874
        %898 = vmatprep.subr.bf16.mxu0 0
        %899 = vmatpush1.bf16.msra.mxu0 %v875
        %900 = vmatprep.subr.bf16.mxu0 0
        %901 = vmatpush1.bf16.msra.mxu0 0
        %902 = vmatprep.subr.bf16.mxu0 0
        %903 = vmatpush1.bf16.msra.mxu0 0
        %904 = vmatprep.subr.bf16.mxu0 0
        %905 = vmatpush1.bf16.msra.mxu0 0
        %906 = vmatprep.subr.bf16.mxu0 0
        %907 = vmatpush1.bf16.msra.mxu0 0
        %908 = vmatprep.subr.bf16.mxu0 0
        %909 = vmatpush1.bf16.msra.mxu0 0
        %910 = vmatprep.subr.bf16.mxu0 0
        %911 = vmatpush1.bf16.msra.mxu0 0
        %912 = vmatprep.subr.bf16.mxu0 0
        %913 = vmatpush1.bf16.msra.mxu0 0
        %914 = vmatprep.subr.bf16.mxu0 0
        %915 = vmatpush1.bf16.msra.mxu0 0
        %916 = vmatprep.mubr.bf16.mxu0 0
        %917 = vmatmul.mubr.bf16.gmra.mrb[0].mxu0 %v823
        %v918 = vpop.f32.mrb[0].mxu0
        %v919 = vadd.f32 0.0, %v918
        %v920 = vpop.f32.mrb[0].mxu0
        %v921 = vpop.f32.mrb[0].mxu0
        %v922 = vadd.f32 0.0, %v921
        %v923 = vpop.f32.mrb[0].mxu0
        %924 = vmatprep.mubr.bf16.mxu0 0
        %925 = vmatmul.mubr.bf16.gmra.mrb[0].mxu0 %v832
        %v926 = vpop.f32.mrb[0].mxu0
        %v927 = vadd.f32 0.0, %v926
        %v928 = vpop.f32.mrb[0].mxu0
        %v929 = vpop.f32.mrb[0].mxu0
        %v930 = vadd.f32 0.0, %v929
        %v931 = vpop.f32.mrb[0].mxu0
        %932 = vmatprep.mubr.bf16.mxu0 0
        %933 = vmatmul.mubr.bf16.gmra.mrb[0].mxu0 %v831
        %v934 = vpop.f32.mrb[0].mxu0
        %v935 = vadd.f32 0.0, %v934
        %v936 = vpop.f32.mrb[0].mxu0
        %v937 = vpop.f32.mrb[0].mxu0
        %v938 = vpop.f32.mrb[0].mxu0
        %939 = vdwg.mxu0
        %v940 = vadd.f32 %v785, %v919
        %v941 = vadd.f32 %v786, %v922
        %v942 = vadd.f32 %v787, %v927
        %v943 = vadd.f32 %v788, %v930
        %v944 = vadd.f32 %v789, %v935
        %v945 = vld [vmem:[%s324] sm:$0xc]
        %s946 = scalar_lea.vmem [#allocation5], 256
        %v947 = vld [vmem:[%s946] sm:$0xf]
        %v948 = vld [vmem:[%s946 + $0x4] sm:$0xf]
        %v949 = vld [vmem:[%s946 + $0x8] sm:$0xf]
        %v950 = vld [vmem:[%s946 + $0xc] sm:$0xf]
        %v951 = vld [vmem:[%s946 + $0x10] sm:$0xf]
        %v952 = vld [vmem:[%s946 + $0x14] sm:$0xf]
        %v953 = vld [vmem:[%s946 + $0x18] sm:$0xf]
        %v954 = vld [vmem:[%s946 + $0x1c] sm:$0xf]
        %v955 = vld [vmem:[%s946 + $0x20] sm:$0xf]
        %v956 = vld [vmem:[%s946 + $0x24] sm:$0xf]
        %v957 = vld [vmem:[%s946 + $0x28] sm:$0xf]
        %v958 = vld [vmem:[%s946 + $0x2c] sm:$0xf]
        %v959 = vld [vmem:[%s946 + $0x30] sm:$0xf]
        %v960 = vld [vmem:[%s946 + $0x34] sm:$0xf]
        %v961 = vld [vmem:[%s946 + $0x38] sm:$0xf]
        %v962 = vld [vmem:[%s946 + $0x3c] sm:$0xf]
        %v964 = vunpack.c.l.b16 %v945
        %v965 = vpack.c.b16 %v403, %v964
        %vm966 = vcmask 1045504
        %v967 = vrot.slane %v965, 2
        %v968 = vrot.slane %v408, 2
        %v969 = vsel %vm966, %v967, %v968
        %v970 = vrot.slane %v810, 2
        %v971 = vsel %vm966, %v968, %v970
        %v991 = vunpack.c.l.b16 %v947
        %v992 = vunpack.c.l.b16 %v948
        %v993 = vunpack.c.l.b16 %v949
        %v994 = vunpack.c.l.b16 %v950
        %v995 = vunpack.c.l.b16 %v951
        %v996 = vunpack.c.l.b16 %v952
        %v997 = vunpack.c.l.b16 %v953
        %v998 = vunpack.c.l.b16 %v954
        %v999 = vunpack.c.l.b16 %v955
        %v1000 = vunpack.c.l.b16 %v956
        %v1001 = vunpack.c.l.b16 %v957
        %v1002 = vunpack.c.l.b16 %v958
        %v1003 = vunpack.c.l.b16 %v959
        %v1004 = vunpack.c.l.b16 %v960
        %v1005 = vunpack.c.l.b16 %v961
        %v1006 = vunpack.c.l.b16 %v962
        %v1007 = vpack.c.b16 %v992, %v991
        %v1008 = vpack.c.b16 %v994, %v993
        %v1009 = vpack.c.b16 %v996, %v995
        %v1010 = vpack.c.b16 %v998, %v997
        %v1011 = vpack.c.b16 %v1000, %v999
        %v1012 = vpack.c.b16 %v1002, %v1001
        %v1013 = vpack.c.b16 %v1004, %v1003
        %v1014 = vpack.c.b16 %v1006, %v1005
        %1023 = vmatprep.subr.bf16.mxu0 0
        %1024 = vmatpush1.bf16.msra.mxu0 %v1007
        %1025 = vmatprep.subr.bf16.mxu0 0
        %1026 = vmatpush1.bf16.msra.mxu0 %v1008
        %1027 = vmatprep.subr.bf16.mxu0 0
        %1028 = vmatpush1.bf16.msra.mxu0 %v1009
        %1029 = vmatprep.subr.bf16.mxu0 0
        %1030 = vmatpush1.bf16.msra.mxu0 %v1010
        %1031 = vmatprep.subr.bf16.mxu0 0
        %1032 = vmatpush1.bf16.msra.mxu0 %v1011
        %1033 = vmatprep.subr.bf16.mxu0 0
        %1034 = vmatpush1.bf16.msra.mxu0 %v1012
        %1035 = vmatprep.subr.bf16.mxu0 0
        %1036 = vmatpush1.bf16.msra.mxu0 %v1013
        %1037 = vmatprep.subr.bf16.mxu0 0
        %1038 = vmatpush1.bf16.msra.mxu0 %v1014
        %1039 = vmatprep.subr.bf16.mxu0 0
        %1040 = vmatpush1.bf16.msra.mxu0 0
        %1041 = vmatprep.subr.bf16.mxu0 0
        %1042 = vmatpush1.bf16.msra.mxu0 0
        %1043 = vmatprep.subr.bf16.mxu0 0
        %1044 = vmatpush1.bf16.msra.mxu0 0
        %1045 = vmatprep.subr.bf16.mxu0 0
        %1046 = vmatpush1.bf16.msra.mxu0 0
        %1047 = vmatprep.subr.bf16.mxu0 0
        %1048 = vmatpush1.bf16.msra.mxu0 0
        %1049 = vmatprep.subr.bf16.mxu0 0
        %1050 = vmatpush1.bf16.msra.mxu0 0
        %1051 = vmatprep.subr.bf16.mxu0 0
        %1052 = vmatpush1.bf16.msra.mxu0 0
        %1053 = vmatprep.subr.bf16.mxu0 0
        %1054 = vmatpush1.bf16.msra.mxu0 0
        %1055 = vmatprep.mubr.bf16.mxu0 0
        %1056 = vmatmul.mubr.bf16.gmra.mrb[0].mxu0 %v969
        %v1057 = vpop.f32.mrb[0].mxu0
        %v1058 = vadd.f32 0.0, %v1057
        %v1059 = vpop.f32.mrb[0].mxu0
        %v1060 = vpop.f32.mrb[0].mxu0
        %v1061 = vadd.f32 0.0, %v1060
        %v1062 = vpop.f32.mrb[0].mxu0
        %1063 = vmatprep.mubr.bf16.mxu0 0
        %1064 = vmatmul.mubr.bf16.gmra.mrb[0].mxu0 %v971
        %v1065 = vpop.f32.mrb[0].mxu0
        %v1066 = vadd.f32 0.0, %v1065
        %v1067 = vpop.f32.mrb[0].mxu0
        %v1068 = vpop.f32.mrb[0].mxu0
        %v1069 = vadd.f32 0.0, %v1068
        %v1070 = vpop.f32.mrb[0].mxu0
        %1071 = vmatprep.mubr.bf16.mxu0 0
        %1072 = vmatmul.mubr.bf16.gmra.mrb[0].mxu0 %v970
        %v1073 = vpop.f32.mrb[0].mxu0
        %v1074 = vadd.f32 0.0, %v1073
        %v1075 = vpop.f32.mrb[0].mxu0
        %v1076 = vpop.f32.mrb[0].mxu0
        %v1077 = vpop.f32.mrb[0].mxu0
        %1078 = vdwg.mxu0
        %v1079 = vadd.f32 %v940, %v1058
        %v1080 = vadd.f32 %v941, %v1061
        %v1081 = vadd.f32 %v942, %v1066
        %v1082 = vadd.f32 %v943, %v1069
        %v1083 = vadd.f32 %v944, %v1074
        %v1084 = vld [vmem:[%s2] sm:$0x1]
        %v1086 = vlaneseq
        %v1087 = vshrl.u32 %v1086, 7
        %v1088 = vsub.s32 0, %v1087
        %v1089 = vrot.slane %v1084, %v1088
        %v1091 = vadd.f32 %v1079, %v1089
        %v1092 = vadd.f32 %v1080, %v1089
        %v1093 = vadd.f32 %v1081, %v1089
        %v1094 = vadd.f32 %v1082, %v1089
        %v1095 = vadd.f32 %v1083, %v1089
        %v1096 = vmax.f32 %v1091, 0.0
        %v1097 = vmax.f32 %v1092, 0.0
        %v1098 = vmax.f32 %v1093, 0.0
        %v1099 = vmax.f32 %v1094, 0.0
        %v1100 = vmax.f32 %v1095, 0.0
        %v1101 = vlaneseq
        %v1102 = vshrl.u32 %v1101, 7
        %v1103 = vadd.s32 %v1102, 8
        %v1104 = vadd.s32 %v1102, 16
        %v1105 = vadd.s32 %v1102, 24
        %v1106 = vadd.s32 %v1102, 32
        %v1107 = vadd.s32 %v1102, 2
        %v1108 = vadd.s32 %v1103, 2
        %v1109 = vadd.s32 %v1104, 2
        %v1110 = vadd.s32 %v1105, 2
        %v1111 = vadd.s32 %v1106, 2
        %s1112 = smul.u32 %s28, 32
        %s1113 = ssub.s32 %s1112, 4
        %v1114 = vstv %s1113
        %v1115 = vadd.s32 %v1114, %v1107
        %v1116 = vadd.s32 %v1114, %v1108
        %v1117 = vadd.s32 %v1114, %v1109
        %v1118 = vadd.s32 %v1114, %v1110
        %v1119 = vadd.s32 %v1114, %v1111
        %vm1120 = vcmp.ge.s32.totalorder %v1115, 0
        %vm1121 = vcmp.ge.s32.totalorder %v1116, 0
        %vm1122 = vcmp.ge.s32.totalorder %v1117, 0
        %vm1123 = vcmp.ge.s32.totalorder %v1118, 0
        %vm1124 = vcmp.ge.s32.totalorder %v1119, 0
        %vm1125 = vcmp.lt.s32.totalorder %v1115, 96
        %vm1126 = vcmp.lt.s32.totalorder %v1116, 96
        %vm1127 = vcmp.lt.s32.totalorder %v1117, 96
        %vm1128 = vcmp.lt.s32.totalorder %v1118, 96
        %vm1129 = vcmp.lt.s32.totalorder %v1119, 96
        %vm1130 = vmand %vm1120, %vm1125
        %vm1131 = vmand %vm1121, %vm1126
        %vm1132 = vmand %vm1122, %vm1127
        %vm1133 = vmand %vm1123, %vm1128
        %vm1134 = vmand %vm1124, %vm1129
        %v1135 = vsel %vm1130, 1, 0
        %v1136 = vsel %vm1131, 1, 0
        %v1137 = vsel %vm1132, 1, 0
        %v1138 = vsel %vm1133, 1, 0
        %v1139 = vsel %vm1134, 1, 0
        %vm1140 = vcmp.eq.s32.totalorder %v1135, 1
        %vm1141 = vcmp.eq.s32.totalorder %v1136, 1
        %vm1142 = vcmp.eq.s32.totalorder %v1137, 1
        %vm1143 = vcmp.eq.s32.totalorder %v1138, 1
        %vm1144 = vcmp.eq.s32.totalorder %v1139, 1
        %v1145 = vsel %vm1140, %v1096, 0.0
        %v1146 = vsel %vm1141, %v1097, 0.0
        %v1147 = vsel %vm1142, %v1098, 0.0
        %v1148 = vsel %vm1143, %v1099, 0.0
        %v1149 = vsel %vm1144, %v1100, 0.0
        %v1150 = vpack.c.bf16 %v1146, %v1145
        %v1151 = vpack.c.bf16 %v1148, %v1147
        %v1152 = vpack.c.bf16 %v1149, %v1149
        %v1156 = vunpack.c.l.b16 %v1150
        %v1157 = vunpack.c.h.b16 %v1150
        %v1158 = vunpack.c.l.b16 %v1151
        %v1159 = vunpack.c.h.b16 %v1151
        %v1160 = vunpack.c.l.b16 %v1152
        %v1161 = vpack.c.b16 %v1156, %v1156
        %v1162 = vpack.c.b16 %v1157, %v1157
        %v1163 = vpack.c.b16 %v1158, %v1158
        %v1164 = vpack.c.b16 %v1159, %v1159
        %v1165 = vpack.c.b16 %v1160, %v1160
        %vm1166 = vcmask 1040384
        %vm1167 = vcmask 1044484
        %vm1168 = vmor %vm1166, %vm1167
        %v1169 = vrot.slane %v1161, 7
        %v1170 = vrot.slane %v1169, 4
        %v1171 = vrot.slane %v1162, 7
        %v1172 = vsel %vm1168, %v1170, %v1171
        %v1173 = vrot.slane %v1171, 4
        %v1174 = vrot.slane %v1163, 7
        %v1175 = vsel %vm1168, %v1173, %v1174
        %v1176 = vrot.slane %v1174, 4
        %v1177 = vrot.slane %v1164, 7
        %v1178 = vsel %vm1168, %v1176, %v1177
        %v1179 = vrot.slane %v1177, 4
        %v1180 = vrot.slane %v1165, 7
        %v1181 = vsel %vm1168, %v1179, %v1180
        %1187 = vst [vmem:[#allocation3] sm:$0xe] %v1169
        %1188 = vst [vmem:[#allocation3 + $0x4] sm:$0xf] %v1172
        %1189 = vst [vmem:[#allocation3 + $0x8] sm:$0xf] %v1175
        %1190 = vst [vmem:[#allocation3 + $0xc] sm:$0xf] %v1178
        %1191 = vst [vmem:[#allocation3 + $0x10] sm:$0x7] %v1181
        %v1192 = vld [vmem:[#allocation3] sm:$0xe]
        %v1193 = vld [vmem:[#allocation3 + $0x4] sm:$0xf]
        %v1194 = vld [vmem:[#allocation3 + $0x8] sm:$0xf]
        %v1195 = vld [vmem:[#allocation3 + $0xc] sm:$0xf]
        %v1196 = vld [vmem:[#allocation3 + $0x10] sm:$0x1]
        %v1197 = vld [vmem:[#allocation8] sm:$0xf]
        %v1198 = vld [vmem:[#allocation8 + $0x4] sm:$0xf]
        %v1199 = vld [vmem:[#allocation8 + $0x8] sm:$0xf]
        %v1200 = vld [vmem:[#allocation8 + $0xc] sm:$0xf]
        %v1201 = vld [vmem:[#allocation8 + $0x10] sm:$0xf]
        %v1202 = vld [vmem:[#allocation8 + $0x14] sm:$0xf]
        %v1203 = vld [vmem:[#allocation8 + $0x18] sm:$0xf]
        %v1204 = vld [vmem:[#allocation8 + $0x1c] sm:$0xf]
        %v1205 = vld [vmem:[#allocation8 + $0x20] sm:$0xf]
        %v1206 = vld [vmem:[#allocation8 + $0x24] sm:$0xf]
        %v1207 = vld [vmem:[#allocation8 + $0x28] sm:$0xf]
        %v1208 = vld [vmem:[#allocation8 + $0x2c] sm:$0xf]
        %v1209 = vld [vmem:[#allocation8 + $0x30] sm:$0xf]
        %v1210 = vld [vmem:[#allocation8 + $0x34] sm:$0xf]
        %v1211 = vld [vmem:[#allocation8 + $0x38] sm:$0xf]
        %v1212 = vld [vmem:[#allocation8 + $0x3c] sm:$0xf]
        %v1213 = vld [vmem:[#allocation3 + $0x10] sm:$0x3]
        %s1214 = scalar_lea.vmem [#allocation8], 64
        %v1215 = vld [vmem:[%s1214] sm:$0xf]
        %v1216 = vld [vmem:[%s1214 + $0x4] sm:$0xf]
        %v1217 = vld [vmem:[%s1214 + $0x8] sm:$0xf]
        %v1218 = vld [vmem:[%s1214 + $0xc] sm:$0xf]
        %v1219 = vld [vmem:[%s1214 + $0x10] sm:$0xf]
        %v1220 = vld [vmem:[%s1214 + $0x14] sm:$0xf]
        %v1221 = vld [vmem:[%s1214 + $0x18] sm:$0xf]
        %v1222 = vld [vmem:[%s1214 + $0x1c] sm:$0xf]
        %v1223 = vld [vmem:[%s1214 + $0x20] sm:$0xf]
        %v1224 = vld [vmem:[%s1214 + $0x24] sm:$0xf]
        %v1225 = vld [vmem:[%s1214 + $0x28] sm:$0xf]
        %v1226 = vld [vmem:[%s1214 + $0x2c] sm:$0xf]
        %v1227 = vld [vmem:[%s1214 + $0x30] sm:$0xf]
        %v1228 = vld [vmem:[%s1214 + $0x34] sm:$0xf]
        %v1229 = vld [vmem:[%s1214 + $0x38] sm:$0xf]
        %v1230 = vld [vmem:[%s1214 + $0x3c] sm:$0xf]
        %v1236 = vunpack.c.l.b16 %v1192
        %v1237 = vunpack.c.l.b16 %v1193
        %v1238 = vunpack.c.l.b16 %v1194
        %v1239 = vunpack.c.l.b16 %v1195
        %v1240 = vunpack.c.l.b16 %v1213
        %v1241 = vpack.c.b16 %v1237, %v1236
        %v1242 = vpack.c.b16 %v1239, %v1238
        %v1243 = vpack.c.b16 %v1240, %v1240
        %v1245 = vshrl.u32 %v1241, 16
        %v1247 = vrot.slane %v1245, 1
        %v1248 = vshll.u32 %v1241, 16
        %v1250 = vrot.slane %v1248, 2
        %v1251 = vor.u32 %v1247, %v1250
        %v1253 = vshrl.u32 %v1242, 16
        %v1255 = vrot.slane %v1253, 1
        %v1256 = vshll.u32 %v1242, 16
        %v1258 = vrot.slane %v1256, 2
        %v1259 = vor.u32 %v1255, %v1258
        %v1260 = vsel %vm811, %v1251, %v1259
        %v1262 = vshrl.u32 %v1243, 16
        %v1264 = vrot.slane %v1262, 1
        %v1265 = vshll.u32 %v1243, 16
        %v1267 = vrot.slane %v1265, 2
        %v1268 = vor.u32 %v1264, %v1267
        %v1269 = vsel %vm811, %v1259, %v1268
        %v1288 = vunpack.c.l.b16 %v1215
        %v1289 = vunpack.c.l.b16 %v1216
        %v1290 = vunpack.c.l.b16 %v1217
        %v1291 = vunpack.c.l.b16 %v1218
        %v1292 = vunpack.c.l.b16 %v1219
        %v1293 = vunpack.c.l.b16 %v1220
        %v1294 = vunpack.c.l.b16 %v1221
        %v1295 = vunpack.c.l.b16 %v1222
        %v1296 = vunpack.c.l.b16 %v1223
        %v1297 = vunpack.c.l.b16 %v1224
        %v1298 = vunpack.c.l.b16 %v1225
        %v1299 = vunpack.c.l.b16 %v1226
        %v1300 = vunpack.c.l.b16 %v1227
        %v1301 = vunpack.c.l.b16 %v1228
        %v1302 = vunpack.c.l.b16 %v1229
        %v1303 = vunpack.c.l.b16 %v1230
        %v1304 = vpack.c.b16 %v1289, %v1288
        %v1305 = vpack.c.b16 %v1291, %v1290
        %v1306 = vpack.c.b16 %v1293, %v1292
        %v1307 = vpack.c.b16 %v1295, %v1294
        %v1308 = vpack.c.b16 %v1297, %v1296
        %v1309 = vpack.c.b16 %v1299, %v1298
        %v1310 = vpack.c.b16 %v1301, %v1300
        %v1311 = vpack.c.b16 %v1303, %v1302
        %1320 = vmatprep.subr.bf16.mxu0 0
        %1321 = vmatpush1.bf16.msra.mxu0 %v1304
        %1322 = vmatprep.subr.bf16.mxu0 0
        %1323 = vmatpush1.bf16.msra.mxu0 %v1305
        %1324 = vmatprep.subr.bf16.mxu0 0
        %1325 = vmatpush1.bf16.msra.mxu0 %v1306
        %1326 = vmatprep.subr.bf16.mxu0 0
        %1327 = vmatpush1.bf16.msra.mxu0 %v1307
        %1328 = vmatprep.subr.bf16.mxu0 0
        %1329 = vmatpush1.bf16.msra.mxu0 %v1308
        %1330 = vmatprep.subr.bf16.mxu0 0
        %1331 = vmatpush1.bf16.msra.mxu0 %v1309
        %1332 = vmatprep.subr.bf16.mxu0 0
        %1333 = vmatpush1.bf16.msra.mxu0 %v1310
        %1334 = vmatprep.subr.bf16.mxu0 0
        %1335 = vmatpush1.bf16.msra.mxu0 %v1311
        %1336 = vmatprep.subr.bf16.mxu0 0
        %1337 = vmatpush1.bf16.msra.mxu0 0
        %1338 = vmatprep.subr.bf16.mxu0 0
        %1339 = vmatpush1.bf16.msra.mxu0 0
        %1340 = vmatprep.subr.bf16.mxu0 0
        %1341 = vmatpush1.bf16.msra.mxu0 0
        %1342 = vmatprep.subr.bf16.mxu0 0
        %1343 = vmatpush1.bf16.msra.mxu0 0
        %1344 = vmatprep.subr.bf16.mxu0 0
        %1345 = vmatpush1.bf16.msra.mxu0 0
        %1346 = vmatprep.subr.bf16.mxu0 0
        %1347 = vmatpush1.bf16.msra.mxu0 0
        %1348 = vmatprep.subr.bf16.mxu0 0
        %1349 = vmatpush1.bf16.msra.mxu0 0
        %1350 = vmatprep.subr.bf16.mxu0 0
        %1351 = vmatpush1.bf16.msra.mxu0 0
        %1352 = vmatprep.mubr.bf16.mxu0 0
        %1353 = vmatmul.mubr.bf16.gmra.mrb[0].mxu0 %v1260
        %v1354 = vpop.f32.mrb[0].mxu0
        %v1355 = vadd.f32 0.0, %v1354
        %v1356 = vpop.f32.mrb[0].mxu0
        %v1357 = vpop.f32.mrb[0].mxu0
        %v1358 = vadd.f32 0.0, %v1357
        %v1359 = vpop.f32.mrb[0].mxu0
        %1360 = vmatprep.mubr.bf16.mxu0 0
        %1361 = vmatmul.mubr.bf16.gmra.mrb[0].mxu0 %v1269
        %v1362 = vpop.f32.mrb[0].mxu0
        %v1363 = vadd.f32 0.0, %v1362
        %v1364 = vpop.f32.mrb[0].mxu0
        %v1365 = vpop.f32.mrb[0].mxu0
        %v1366 = vadd.f32 0.0, %v1365
        %v1367 = vpop.f32.mrb[0].mxu0
        %1368 = vdwg.mxu0
        %v1370 = vunpack.c.l.b16 %v1196
        %v1371 = vpack.c.b16 %v1370, %v1370
        %v1372 = vrot.slane %v1241, 1
        %v1373 = vrot.slane %v1242, 1
        %v1374 = vsel %vm672, %v1372, %v1373
        %v1375 = vrot.slane %v1371, 1
        %v1376 = vsel %vm672, %v1373, %v1375
        %v1395 = vunpack.c.l.b16 %v1197
        %v1396 = vunpack.c.l.b16 %v1198
        %v1397 = vunpack.c.l.b16 %v1199
        %v1398 = vunpack.c.l.b16 %v1200
        %v1399 = vunpack.c.l.b16 %v1201
        %v1400 = vunpack.c.l.b16 %v1202
        %v1401 = vunpack.c.l.b16 %v1203
        %v1402 = vunpack.c.l.b16 %v1204
        %v1403 = vunpack.c.l.b16 %v1205
        %v1404 = vunpack.c.l.b16 %v1206
        %v1405 = vunpack.c.l.b16 %v1207
        %v1406 = vunpack.c.l.b16 %v1208
        %v1407 = vunpack.c.l.b16 %v1209
        %v1408 = vunpack.c.l.b16 %v1210
        %v1409 = vunpack.c.l.b16 %v1211
        %v1410 = vunpack.c.l.b16 %v1212
        %v1411 = vpack.c.b16 %v1396, %v1395
        %v1412 = vpack.c.b16 %v1398, %v1397
        %v1413 = vpack.c.b16 %v1400, %v1399
        %v1414 = vpack.c.b16 %v1402, %v1401
        %v1415 = vpack.c.b16 %v1404, %v1403
        %v1416 = vpack.c.b16 %v1406, %v1405
        %v1417 = vpack.c.b16 %v1408, %v1407
        %v1418 = vpack.c.b16 %v1410, %v1409
        %1427 = vmatprep.subr.bf16.mxu0 0
        %1428 = vmatpush1.bf16.msra.mxu0 %v1411
        %1429 = vmatprep.subr.bf16.mxu0 0
        %1430 = vmatpush1.bf16.msra.mxu0 %v1412
        %1431 = vmatprep.subr.bf16.mxu0 0
        %1432 = vmatpush1.bf16.msra.mxu0 %v1413
        %1433 = vmatprep.subr.bf16.mxu0 0
        %1434 = vmatpush1.bf16.msra.mxu0 %v1414
        %1435 = vmatprep.subr.bf16.mxu0 0
        %1436 = vmatpush1.bf16.msra.mxu0 %v1415
        %1437 = vmatprep.subr.bf16.mxu0 0
        %1438 = vmatpush1.bf16.msra.mxu0 %v1416
        %1439 = vmatprep.subr.bf16.mxu0 0
        %1440 = vmatpush1.bf16.msra.mxu0 %v1417
        %1441 = vmatprep.subr.bf16.mxu0 0
        %1442 = vmatpush1.bf16.msra.mxu0 %v1418
        %1443 = vmatprep.subr.bf16.mxu0 0
        %1444 = vmatpush1.bf16.msra.mxu0 0
        %1445 = vmatprep.subr.bf16.mxu0 0
        %1446 = vmatpush1.bf16.msra.mxu0 0
        %1447 = vmatprep.subr.bf16.mxu0 0
        %1448 = vmatpush1.bf16.msra.mxu0 0
        %1449 = vmatprep.subr.bf16.mxu0 0
        %1450 = vmatpush1.bf16.msra.mxu0 0
        %1451 = vmatprep.subr.bf16.mxu0 0
        %1452 = vmatpush1.bf16.msra.mxu0 0
        %1453 = vmatprep.subr.bf16.mxu0 0
        %1454 = vmatpush1.bf16.msra.mxu0 0
        %1455 = vmatprep.subr.bf16.mxu0 0
        %1456 = vmatpush1.bf16.msra.mxu0 0
        %1457 = vmatprep.subr.bf16.mxu0 0
        %1458 = vmatpush1.bf16.msra.mxu0 0
        %1459 = vmatprep.mubr.bf16.mxu0 0
        %1460 = vmatmul.mubr.bf16.gmra.mrb[0].mxu0 %v1374
        %v1461 = vpop.f32.mrb[0].mxu0
        %v1462 = vadd.f32 %v1355, %v1461
        %v1463 = vpop.f32.mrb[0].mxu0
        %v1464 = vpop.f32.mrb[0].mxu0
        %v1465 = vadd.f32 %v1358, %v1464
        %v1466 = vpop.f32.mrb[0].mxu0
        %1467 = vmatprep.mubr.bf16.mxu0 0
        %1468 = vmatmul.mubr.bf16.gmra.mrb[0].mxu0 %v1376
        %v1469 = vpop.f32.mrb[0].mxu0
        %v1470 = vadd.f32 %v1363, %v1469
        %v1471 = vpop.f32.mrb[0].mxu0
        %v1472 = vpop.f32.mrb[0].mxu0
        %v1473 = vadd.f32 %v1366, %v1472
        %v1474 = vpop.f32.mrb[0].mxu0
        %1475 = vdwg.mxu0
        %v1476 = vld [vmem:[#allocation3] sm:$0xc]
        %s1477 = scalar_lea.vmem [#allocation8], 128
        %v1478 = vld [vmem:[%s1477] sm:$0xf]
        %v1479 = vld [vmem:[%s1477 + $0x4] sm:$0xf]
        %v1480 = vld [vmem:[%s1477 + $0x8] sm:$0xf]
        %v1481 = vld [vmem:[%s1477 + $0xc] sm:$0xf]
        %v1482 = vld [vmem:[%s1477 + $0x10] sm:$0xf]
        %v1483 = vld [vmem:[%s1477 + $0x14] sm:$0xf]
        %v1484 = vld [vmem:[%s1477 + $0x18] sm:$0xf]
        %v1485 = vld [vmem:[%s1477 + $0x1c] sm:$0xf]
        %v1486 = vld [vmem:[%s1477 + $0x20] sm:$0xf]
        %v1487 = vld [vmem:[%s1477 + $0x24] sm:$0xf]
        %v1488 = vld [vmem:[%s1477 + $0x28] sm:$0xf]
        %v1489 = vld [vmem:[%s1477 + $0x2c] sm:$0xf]
        %v1490 = vld [vmem:[%s1477 + $0x30] sm:$0xf]
        %v1491 = vld [vmem:[%s1477 + $0x34] sm:$0xf]
        %v1492 = vld [vmem:[%s1477 + $0x38] sm:$0xf]
        %v1493 = vld [vmem:[%s1477 + $0x3c] sm:$0xf]
        %v1495 = vunpack.c.l.b16 %v1476
        %v1496 = vpack.c.b16 %v1237, %v1495
        %v1497 = vrot.slane %v1496, 2
        %v1498 = vrot.slane %v1242, 2
        %v1499 = vsel %vm966, %v1497, %v1498
        %v1500 = vrot.slane %v1243, 2
        %v1501 = vsel %vm966, %v1498, %v1500
        %v1520 = vunpack.c.l.b16 %v1478
        %v1521 = vunpack.c.l.b16 %v1479
        %v1522 = vunpack.c.l.b16 %v1480
        %v1523 = vunpack.c.l.b16 %v1481
        %v1524 = vunpack.c.l.b16 %v1482
        %v1525 = vunpack.c.l.b16 %v1483
        %v1526 = vunpack.c.l.b16 %v1484
        %v1527 = vunpack.c.l.b16 %v1485
        %v1528 = vunpack.c.l.b16 %v1486
        %v1529 = vunpack.c.l.b16 %v1487
        %v1530 = vunpack.c.l.b16 %v1488
        %v1531 = vunpack.c.l.b16 %v1489
        %v1532 = vunpack.c.l.b16 %v1490
        %v1533 = vunpack.c.l.b16 %v1491
        %v1534 = vunpack.c.l.b16 %v1492
        %v1535 = vunpack.c.l.b16 %v1493
        %v1536 = vpack.c.b16 %v1521, %v1520
        %v1537 = vpack.c.b16 %v1523, %v1522
        %v1538 = vpack.c.b16 %v1525, %v1524
        %v1539 = vpack.c.b16 %v1527, %v1526
        %v1540 = vpack.c.b16 %v1529, %v1528
        %v1541 = vpack.c.b16 %v1531, %v1530
        %v1542 = vpack.c.b16 %v1533, %v1532
        %v1543 = vpack.c.b16 %v1535, %v1534
        %1552 = vmatprep.subr.bf16.mxu0 0
        %1553 = vmatpush1.bf16.msra.mxu0 %v1536
        %1554 = vmatprep.subr.bf16.mxu0 0
        %1555 = vmatpush1.bf16.msra.mxu0 %v1537
        %1556 = vmatprep.subr.bf16.mxu0 0
        %1557 = vmatpush1.bf16.msra.mxu0 %v1538
        %1558 = vmatprep.subr.bf16.mxu0 0
        %1559 = vmatpush1.bf16.msra.mxu0 %v1539
        %1560 = vmatprep.subr.bf16.mxu0 0
        %1561 = vmatpush1.bf16.msra.mxu0 %v1540
        %1562 = vmatprep.subr.bf16.mxu0 0
        %1563 = vmatpush1.bf16.msra.mxu0 %v1541
        %1564 = vmatprep.subr.bf16.mxu0 0
        %1565 = vmatpush1.bf16.msra.mxu0 %v1542
        %1566 = vmatprep.subr.bf16.mxu0 0
        %1567 = vmatpush1.bf16.msra.mxu0 %v1543
        %1568 = vmatprep.subr.bf16.mxu0 0
        %1569 = vmatpush1.bf16.msra.mxu0 0
        %1570 = vmatprep.subr.bf16.mxu0 0
        %1571 = vmatpush1.bf16.msra.mxu0 0
        %1572 = vmatprep.subr.bf16.mxu0 0
        %1573 = vmatpush1.bf16.msra.mxu0 0
        %1574 = vmatprep.subr.bf16.mxu0 0
        %1575 = vmatpush1.bf16.msra.mxu0 0
        %1576 = vmatprep.subr.bf16.mxu0 0
        %1577 = vmatpush1.bf16.msra.mxu0 0
        %1578 = vmatprep.subr.bf16.mxu0 0
        %1579 = vmatpush1.bf16.msra.mxu0 0
        %1580 = vmatprep.subr.bf16.mxu0 0
        %1581 = vmatpush1.bf16.msra.mxu0 0
        %1582 = vmatprep.subr.bf16.mxu0 0
        %1583 = vmatpush1.bf16.msra.mxu0 0
        %1584 = vmatprep.mubr.bf16.mxu0 0
        %1585 = vmatmul.mubr.bf16.gmra.mrb[0].mxu0 %v1499
        %v1586 = vpop.f32.mrb[0].mxu0
        %v1587 = vadd.f32 0.0, %v1586
        %v1588 = vpop.f32.mrb[0].mxu0
        %v1589 = vpop.f32.mrb[0].mxu0
        %v1590 = vadd.f32 0.0, %v1589
        %v1591 = vpop.f32.mrb[0].mxu0
        %1592 = vmatprep.mubr.bf16.mxu0 0
        %1593 = vmatmul.mubr.bf16.gmra.mrb[0].mxu0 %v1501
        %v1594 = vpop.f32.mrb[0].mxu0
        %v1595 = vadd.f32 0.0, %v1594
        %v1596 = vpop.f32.mrb[0].mxu0
        %v1597 = vpop.f32.mrb[0].mxu0
        %v1598 = vadd.f32 0.0, %v1597
        %v1599 = vpop.f32.mrb[0].mxu0
        %1600 = vdwg.mxu0
        %v1601 = vadd.f32 %v1462, %v1587
        %v1602 = vadd.f32 %v1465, %v1590
        %v1603 = vadd.f32 %v1470, %v1595
        %v1604 = vadd.f32 %v1473, %v1598
        %v1605 = vld [vmem:[#allocation3 + $0x10] sm:$0x7]
        %s1606 = scalar_lea.vmem [#allocation8], 192
        %v1607 = vld [vmem:[%s1606] sm:$0xf]
        %v1608 = vld [vmem:[%s1606 + $0x4] sm:$0xf]
        %v1609 = vld [vmem:[%s1606 + $0x8] sm:$0xf]
        %v1610 = vld [vmem:[%s1606 + $0xc] sm:$0xf]
        %v1611 = vld [vmem:[%s1606 + $0x10] sm:$0xf]
        %v1612 = vld [vmem:[%s1606 + $0x14] sm:$0xf]
        %v1613 = vld [vmem:[%s1606 + $0x18] sm:$0xf]
        %v1614 = vld [vmem:[%s1606 + $0x1c] sm:$0xf]
        %v1615 = vld [vmem:[%s1606 + $0x20] sm:$0xf]
        %v1616 = vld [vmem:[%s1606 + $0x24] sm:$0xf]
        %v1617 = vld [vmem:[%s1606 + $0x28] sm:$0xf]
        %v1618 = vld [vmem:[%s1606 + $0x2c] sm:$0xf]
        %v1619 = vld [vmem:[%s1606 + $0x30] sm:$0xf]
        %v1620 = vld [vmem:[%s1606 + $0x34] sm:$0xf]
        %v1621 = vld [vmem:[%s1606 + $0x38] sm:$0xf]
        %v1622 = vld [vmem:[%s1606 + $0x3c] sm:$0xf]
        %v1624 = vunpack.c.l.b16 %v1605
        %v1625 = vpack.c.b16 %v1624, %v1624
        %vm1626 = vsmask.f32 5376
        %v1628 = vshrl.u32 %v1496, 16
        %v1630 = vrot.slane %v1628, 2
        %v1631 = vshll.u32 %v1496, 16
        %v1633 = vrot.slane %v1631, 3
        %v1634 = vor.u32 %v1630, %v1633
        %v1635 = vrot.slane %v1253, 2
        %v1636 = vrot.slane %v1256, 3
        %v1637 = vor.u32 %v1635, %v1636
        %v1638 = vsel %vm1626, %v1634, %v1637
        %v1640 = vshrl.u32 %v1625, 16
        %v1642 = vrot.slane %v1640, 2
        %v1643 = vshll.u32 %v1625, 16
        %v1645 = vrot.slane %v1643, 3
        %v1646 = vor.u32 %v1642, %v1645
        %v1647 = vsel %vm1626, %v1637, %v1646
        %v1666 = vunpack.c.l.b16 %v1607
        %v1667 = vunpack.c.l.b16 %v1608
        %v1668 = vunpack.c.l.b16 %v1609
        %v1669 = vunpack.c.l.b16 %v1610
        %v1670 = vunpack.c.l.b16 %v1611
        %v1671 = vunpack.c.l.b16 %v1612
        %v1672 = vunpack.c.l.b16 %v1613
        %v1673 = vunpack.c.l.b16 %v1614
        %v1674 = vunpack.c.l.b16 %v1615
        %v1675 = vunpack.c.l.b16 %v1616
        %v1676 = vunpack.c.l.b16 %v1617
        %v1677 = vunpack.c.l.b16 %v1618
        %v1678 = vunpack.c.l.b16 %v1619
        %v1679 = vunpack.c.l.b16 %v1620
        %v1680 = vunpack.c.l.b16 %v1621
        %v1681 = vunpack.c.l.b16 %v1622
        %v1682 = vpack.c.b16 %v1667, %v1666
        %v1683 = vpack.c.b16 %v1669, %v1668
        %v1684 = vpack.c.b16 %v1671, %v1670
        %v1685 = vpack.c.b16 %v1673, %v1672
        %v1686 = vpack.c.b16 %v1675, %v1674
        %v1687 = vpack.c.b16 %v1677, %v1676
        %v1688 = vpack.c.b16 %v1679, %v1678
        %v1689 = vpack.c.b16 %v1681, %v1680
        %1698 = vmatprep.subr.bf16.mxu0 0
        %1699 = vmatpush1.bf16.msra.mxu0 %v1682
        %1700 = vmatprep.subr.bf16.mxu0 0
        %1701 = vmatpush1.bf16.msra.mxu0 %v1683
        %1702 = vmatprep.subr.bf16.mxu0 0
        %1703 = vmatpush1.bf16.msra.mxu0 %v1684
        %1704 = vmatprep.subr.bf16.mxu0 0
        %1705 = vmatpush1.bf16.msra.mxu0 %v1685
        %1706 = vmatprep.subr.bf16.mxu0 0
        %1707 = vmatpush1.bf16.msra.mxu0 %v1686
        %1708 = vmatprep.subr.bf16.mxu0 0
        %1709 = vmatpush1.bf16.msra.mxu0 %v1687
        %1710 = vmatprep.subr.bf16.mxu0 0
        %1711 = vmatpush1.bf16.msra.mxu0 %v1688
        %1712 = vmatprep.subr.bf16.mxu0 0
        %1713 = vmatpush1.bf16.msra.mxu0 %v1689
        %1714 = vmatprep.subr.bf16.mxu0 0
        %1715 = vmatpush1.bf16.msra.mxu0 0
        %1716 = vmatprep.subr.bf16.mxu0 0
        %1717 = vmatpush1.bf16.msra.mxu0 0
        %1718 = vmatprep.subr.bf16.mxu0 0
        %1719 = vmatpush1.bf16.msra.mxu0 0
        %1720 = vmatprep.subr.bf16.mxu0 0
        %1721 = vmatpush1.bf16.msra.mxu0 0
        %1722 = vmatprep.subr.bf16.mxu0 0
        %1723 = vmatpush1.bf16.msra.mxu0 0
        %1724 = vmatprep.subr.bf16.mxu0 0
        %1725 = vmatpush1.bf16.msra.mxu0 0
        %1726 = vmatprep.subr.bf16.mxu0 0
        %1727 = vmatpush1.bf16.msra.mxu0 0
        %1728 = vmatprep.subr.bf16.mxu0 0
        %1729 = vmatpush1.bf16.msra.mxu0 0
        %1730 = vmatprep.mubr.bf16.mxu0 0
        %1731 = vmatmul.mubr.bf16.gmra.mrb[0].mxu0 %v1638
        %v1732 = vpop.f32.mrb[0].mxu0
        %v1733 = vadd.f32 0.0, %v1732
        %v1734 = vpop.f32.mrb[0].mxu0
        %v1735 = vpop.f32.mrb[0].mxu0
        %v1736 = vadd.f32 0.0, %v1735
        %v1737 = vpop.f32.mrb[0].mxu0
        %1738 = vmatprep.mubr.bf16.mxu0 0
        %1739 = vmatmul.mubr.bf16.gmra.mrb[0].mxu0 %v1647
        %v1740 = vpop.f32.mrb[0].mxu0
        %v1741 = vadd.f32 0.0, %v1740
        %v1742 = vpop.f32.mrb[0].mxu0
        %v1743 = vpop.f32.mrb[0].mxu0
        %v1744 = vadd.f32 0.0, %v1743
        %v1745 = vpop.f32.mrb[0].mxu0
        %1746 = vdwg.mxu0
        %v1747 = vadd.f32 %v1601, %v1733
        %v1748 = vadd.f32 %v1602, %v1736
        %v1749 = vadd.f32 %v1603, %v1741
        %v1750 = vadd.f32 %v1604, %v1744
        %v1751 = vld [vmem:[#allocation3] sm:$0x8]
        %s1752 = scalar_lea.vmem [#allocation8], 256
        %v1753 = vld [vmem:[%s1752] sm:$0xf]
        %v1754 = vld [vmem:[%s1752 + $0x4] sm:$0xf]
        %v1755 = vld [vmem:[%s1752 + $0x8] sm:$0xf]
        %v1756 = vld [vmem:[%s1752 + $0xc] sm:$0xf]
        %v1757 = vld [vmem:[%s1752 + $0x10] sm:$0xf]
        %v1758 = vld [vmem:[%s1752 + $0x14] sm:$0xf]
        %v1759 = vld [vmem:[%s1752 + $0x18] sm:$0xf]
        %v1760 = vld [vmem:[%s1752 + $0x1c] sm:$0xf]
        %v1761 = vld [vmem:[%s1752 + $0x20] sm:$0xf]
        %v1762 = vld [vmem:[%s1752 + $0x24] sm:$0xf]
        %v1763 = vld [vmem:[%s1752 + $0x28] sm:$0xf]
        %v1764 = vld [vmem:[%s1752 + $0x2c] sm:$0xf]
        %v1765 = vld [vmem:[%s1752 + $0x30] sm:$0xf]
        %v1766 = vld [vmem:[%s1752 + $0x34] sm:$0xf]
        %v1767 = vld [vmem:[%s1752 + $0x38] sm:$0xf]
        %v1768 = vld [vmem:[%s1752 + $0x3c] sm:$0xf]
        %v1770 = vunpack.c.l.b16 %v1751
        %v1771 = vpack.c.b16 %v1237, %v1770
        %vm1772 = vcmask 1044480
        %v1773 = vrot.slane %v1771, 3
        %v1774 = vrot.slane %v1242, 3
        %v1775 = vsel %vm1772, %v1773, %v1774
        %v1776 = vrot.slane %v1625, 3
        %v1777 = vsel %vm1772, %v1774, %v1776
        %v1796 = vunpack.c.l.b16 %v1753
        %v1797 = vunpack.c.l.b16 %v1754
        %v1798 = vunpack.c.l.b16 %v1755
        %v1799 = vunpack.c.l.b16 %v1756
        %v1800 = vunpack.c.l.b16 %v1757
        %v1801 = vunpack.c.l.b16 %v1758
        %v1802 = vunpack.c.l.b16 %v1759
        %v1803 = vunpack.c.l.b16 %v1760
        %v1804 = vunpack.c.l.b16 %v1761
        %v1805 = vunpack.c.l.b16 %v1762
        %v1806 = vunpack.c.l.b16 %v1763
        %v1807 = vunpack.c.l.b16 %v1764
        %v1808 = vunpack.c.l.b16 %v1765
        %v1809 = vunpack.c.l.b16 %v1766
        %v1810 = vunpack.c.l.b16 %v1767
        %v1811 = vunpack.c.l.b16 %v1768
        %v1812 = vpack.c.b16 %v1797, %v1796
        %v1813 = vpack.c.b16 %v1799, %v1798
        %v1814 = vpack.c.b16 %v1801, %v1800
        %v1815 = vpack.c.b16 %v1803, %v1802
        %v1816 = vpack.c.b16 %v1805, %v1804
        %v1817 = vpack.c.b16 %v1807, %v1806
        %v1818 = vpack.c.b16 %v1809, %v1808
        %v1819 = vpack.c.b16 %v1811, %v1810
        %1828 = vmatprep.subr.bf16.mxu0 0
        %1829 = vmatpush1.bf16.msra.mxu0 %v1812
        %1830 = vmatprep.subr.bf16.mxu0 0
        %1831 = vmatpush1.bf16.msra.mxu0 %v1813
        %1832 = vmatprep.subr.bf16.mxu0 0
        %1833 = vmatpush1.bf16.msra.mxu0 %v1814
        %1834 = vmatprep.subr.bf16.mxu0 0
        %1835 = vmatpush1.bf16.msra.mxu0 %v1815
        %1836 = vmatprep.subr.bf16.mxu0 0
        %1837 = vmatpush1.bf16.msra.mxu0 %v1816
        %1838 = vmatprep.subr.bf16.mxu0 0
        %1839 = vmatpush1.bf16.msra.mxu0 %v1817
        %1840 = vmatprep.subr.bf16.mxu0 0
        %1841 = vmatpush1.bf16.msra.mxu0 %v1818
        %1842 = vmatprep.subr.bf16.mxu0 0
        %1843 = vmatpush1.bf16.msra.mxu0 %v1819
        %1844 = vmatprep.subr.bf16.mxu0 0
        %1845 = vmatpush1.bf16.msra.mxu0 0
        %1846 = vmatprep.subr.bf16.mxu0 0
        %1847 = vmatpush1.bf16.msra.mxu0 0
        %1848 = vmatprep.subr.bf16.mxu0 0
        %1849 = vmatpush1.bf16.msra.mxu0 0
        %1850 = vmatprep.subr.bf16.mxu0 0
        %1851 = vmatpush1.bf16.msra.mxu0 0
        %1852 = vmatprep.subr.bf16.mxu0 0
        %1853 = vmatpush1.bf16.msra.mxu0 0
        %1854 = vmatprep.subr.bf16.mxu0 0
        %1855 = vmatpush1.bf16.msra.mxu0 0
        %1856 = vmatprep.subr.bf16.mxu0 0
        %1857 = vmatpush1.bf16.msra.mxu0 0
        %1858 = vmatprep.subr.bf16.mxu0 0
        %1859 = vmatpush1.bf16.msra.mxu0 0
        %1860 = vmatprep.mubr.bf16.mxu0 0
        %1861 = vmatmul.mubr.bf16.gmra.mrb[0].mxu0 %v1775
        %v1862 = vpop.f32.mrb[0].mxu0
        %v1863 = vadd.f32 0.0, %v1862
        %v1864 = vpop.f32.mrb[0].mxu0
        %v1865 = vpop.f32.mrb[0].mxu0
        %v1866 = vadd.f32 0.0, %v1865
        %v1867 = vpop.f32.mrb[0].mxu0
        %1868 = vmatprep.mubr.bf16.mxu0 0
        %1869 = vmatmul.mubr.bf16.gmra.mrb[0].mxu0 %v1777
        %v1870 = vpop.f32.mrb[0].mxu0
        %v1871 = vadd.f32 0.0, %v1870
        %v1872 = vpop.f32.mrb[0].mxu0
        %v1873 = vpop.f32.mrb[0].mxu0
        %v1874 = vadd.f32 0.0, %v1873
        %v1875 = vpop.f32.mrb[0].mxu0
        %1876 = vdwg.mxu0
        %v1877 = vadd.f32 %v1747, %v1863
        %v1878 = vadd.f32 %v1748, %v1866
        %v1879 = vadd.f32 %v1749, %v1871
        %v1880 = vadd.f32 %v1750, %v1874
        %v1881 = vld [vmem:[%s4] sm:$0x1]
        %v1883 = vlaneseq
        %v1884 = vshrl.u32 %v1883, 7
        %v1885 = vsub.s32 0, %v1884
        %v1886 = vrot.slane %v1881, %v1885
        %v1888 = vadd.f32 %v1877, %v1886
        %v1889 = vadd.f32 %v1878, %v1886
        %v1890 = vadd.f32 %v1879, %v1886
        %v1891 = vadd.f32 %v1880, %v1886
        %v1892 = vld [vmem:[%s324] sm:$0xc]
        %v1893 = vld [vmem:[%s324 + $0x4] sm:$0xf]
        %v1894 = vld [vmem:[%s324 + $0x8] sm:$0xf]
        %v1895 = vld [vmem:[%s324 + $0xc] sm:$0xf]
        %v1896 = vld [vmem:[%s324 + $0x10] sm:$0x3]
        %v1897 = vld [vmem:[#allocation10] sm:$0xf]
        %v1898 = vld [vmem:[#allocation10 + $0x4] sm:$0xf]
        %v1899 = vld [vmem:[#allocation10 + $0x8] sm:$0xf]
        %v1900 = vld [vmem:[#allocation10 + $0xc] sm:$0xf]
        %v1901 = vld [vmem:[#allocation10 + $0x10] sm:$0xf]
        %v1902 = vld [vmem:[#allocation10 + $0x14] sm:$0xf]
        %v1903 = vld [vmem:[#allocation10 + $0x18] sm:$0xf]
        %v1904 = vld [vmem:[#allocation10 + $0x1c] sm:$0xf]
        %v1905 = vld [vmem:[#allocation10 + $0x20] sm:$0xf]
        %v1906 = vld [vmem:[#allocation10 + $0x24] sm:$0xf]
        %v1907 = vld [vmem:[#allocation10 + $0x28] sm:$0xf]
        %v1908 = vld [vmem:[#allocation10 + $0x2c] sm:$0xf]
        %v1909 = vld [vmem:[#allocation10 + $0x30] sm:$0xf]
        %v1910 = vld [vmem:[#allocation10 + $0x34] sm:$0xf]
        %v1911 = vld [vmem:[#allocation10 + $0x38] sm:$0xf]
        %v1912 = vld [vmem:[#allocation10 + $0x3c] sm:$0xf]
        %v1913 = vld [vmem:[%s6] sm:$0x1]
        %v1915 = vlaneseq
        %v1916 = vshrl.u32 %v1915, 7
        %v1917 = vsub.s32 0, %v1916
        %v1918 = vrot.slane %v1913, %v1917
        %v1925 = vunpack.c.l.b16 %v1892
        %v1926 = vunpack.c.l.b16 %v1893
        %v1927 = vunpack.c.l.b16 %v1894
        %v1928 = vunpack.c.l.b16 %v1895
        %v1929 = vunpack.c.l.b16 %v1896
        %v1930 = vpack.c.b16 %v1926, %v1925
        %v1931 = vpack.c.b16 %v1928, %v1927
        %v1932 = vpack.c.b16 %v1929, %v1929
        %v1933 = vrot.slane %v1930, 2
        %v1934 = vrot.slane %v1931, 2
        %v1935 = vsel %vm966, %v1933, %v1934
        %v1936 = vrot.slane %v1932, 2
        %v1937 = vsel %vm966, %v1934, %v1936
        %v1956 = vunpack.c.l.b16 %v1897
        %v1957 = vunpack.c.l.b16 %v1898
        %v1958 = vunpack.c.l.b16 %v1899
        %v1959 = vunpack.c.l.b16 %v1900
        %v1960 = vunpack.c.l.b16 %v1901
        %v1961 = vunpack.c.l.b16 %v1902
        %v1962 = vunpack.c.l.b16 %v1903
        %v1963 = vunpack.c.l.b16 %v1904
        %v1964 = vunpack.c.l.b16 %v1905
        %v1965 = vunpack.c.l.b16 %v1906
        %v1966 = vunpack.c.l.b16 %v1907
        %v1967 = vunpack.c.l.b16 %v1908
        %v1968 = vunpack.c.l.b16 %v1909
        %v1969 = vunpack.c.l.b16 %v1910
        %v1970 = vunpack.c.l.b16 %v1911
        %v1971 = vunpack.c.l.b16 %v1912
        %v1972 = vpack.c.b16 %v1957, %v1956
        %v1973 = vpack.c.b16 %v1959, %v1958
        %v1974 = vpack.c.b16 %v1961, %v1960
        %v1975 = vpack.c.b16 %v1963, %v1962
        %v1976 = vpack.c.b16 %v1965, %v1964
        %v1977 = vpack.c.b16 %v1967, %v1966
        %v1978 = vpack.c.b16 %v1969, %v1968
        %v1979 = vpack.c.b16 %v1971, %v1970
        %1988 = vmatprep.subr.bf16.mxu0 0
        %1989 = vmatpush1.bf16.msra.mxu0 %v1972
        %1990 = vmatprep.subr.bf16.mxu0 0
        %1991 = vmatpush1.bf16.msra.mxu0 %v1973
        %1992 = vmatprep.subr.bf16.mxu0 0
        %1993 = vmatpush1.bf16.msra.mxu0 %v1974
        %1994 = vmatprep.subr.bf16.mxu0 0
        %1995 = vmatpush1.bf16.msra.mxu0 %v1975
        %1996 = vmatprep.subr.bf16.mxu0 0
        %1997 = vmatpush1.bf16.msra.mxu0 %v1976
        %1998 = vmatprep.subr.bf16.mxu0 0
        %1999 = vmatpush1.bf16.msra.mxu0 %v1977
        %2000 = vmatprep.subr.bf16.mxu0 0
        %2001 = vmatpush1.bf16.msra.mxu0 %v1978
        %2002 = vmatprep.subr.bf16.mxu0 0
        %2003 = vmatpush1.bf16.msra.mxu0 %v1979
        %2004 = vmatprep.subr.bf16.mxu0 0
        %2005 = vmatpush1.bf16.msra.mxu0 0
        %2006 = vmatprep.subr.bf16.mxu0 0
        %2007 = vmatpush1.bf16.msra.mxu0 0
        %2008 = vmatprep.subr.bf16.mxu0 0
        %2009 = vmatpush1.bf16.msra.mxu0 0
        %2010 = vmatprep.subr.bf16.mxu0 0
        %2011 = vmatpush1.bf16.msra.mxu0 0
        %2012 = vmatprep.subr.bf16.mxu0 0
        %2013 = vmatpush1.bf16.msra.mxu0 0
        %2014 = vmatprep.subr.bf16.mxu0 0
        %2015 = vmatpush1.bf16.msra.mxu0 0
        %2016 = vmatprep.subr.bf16.mxu0 0
        %2017 = vmatpush1.bf16.msra.mxu0 0
        %2018 = vmatprep.subr.bf16.mxu0 0
        %2019 = vmatpush1.bf16.msra.mxu0 0
        %2020 = vmatprep.mubr.bf16.mxu0 0
        %2021 = vmatmul.mubr.bf16.gmra.mrb[0].mxu0 %v1935
        %v2022 = vpop.f32.mrb[0].mxu0
        %v2023 = vadd.f32 %v1918, %v2022
        %v2024 = vpop.f32.mrb[0].mxu0
        %v2025 = vpop.f32.mrb[0].mxu0
        %v2026 = vadd.f32 %v1918, %v2025
        %v2027 = vpop.f32.mrb[0].mxu0
        %2028 = vmatprep.mubr.bf16.mxu0 0
        %2029 = vmatmul.mubr.bf16.gmra.mrb[0].mxu0 %v1937
        %v2030 = vpop.f32.mrb[0].mxu0
        %v2031 = vadd.f32 %v1918, %v2030
        %v2032 = vpop.f32.mrb[0].mxu0
        %v2033 = vpop.f32.mrb[0].mxu0
        %v2034 = vadd.f32 %v1918, %v2033
        %v2035 = vpop.f32.mrb[0].mxu0
        %2036 = vdwg.mxu0
        %v2037 = vadd.f32 %v1888, %v2023
        %v2038 = vadd.f32 %v1889, %v2026
        %v2039 = vadd.f32 %v1890, %v2031
        %v2040 = vadd.f32 %v1891, %v2034
        %v2041 = vmax.f32 %v2037, 0.0
        %v2042 = vmax.f32 %v2038, 0.0
        %v2043 = vmax.f32 %v2039, 0.0
        %v2044 = vmax.f32 %v2040, 0.0
        %v2045 = vpack.c.bf16 %v2042, %v2041
        %v2046 = vpack.c.bf16 %v2044, %v2043
        %v2049 = vunpack.c.l.b16 %v2045
        %v2050 = vunpack.c.h.b16 %v2045
        %v2051 = vunpack.c.l.b16 %v2046
        %v2052 = vunpack.c.h.b16 %v2046
        %v2053 = vpack.c.b16 %v2049, %v2049
        %v2054 = vpack.c.b16 %v2050, %v2050
        %v2055 = vpack.c.b16 %v2051, %v2051
        %v2056 = vpack.c.b16 %v2052, %v2052
        %2061 = vst [vmem:[%s288] sm:$0xf] %v2053
        %2062 = vst [vmem:[%s288 + $0x4] sm:$0xf] %v2054
        %2063 = vst [vmem:[%s288 + $0x8] sm:$0xf] %v2055
        %2064 = vst [vmem:[%s288 + $0xc] sm:$0xf] %v2056
        %s2065 = sand.u32 %s171, 1
        %s2066 = scalar_lea.sflag [#allocation7], %s2065
        %s2067 = sand.u32 %s171, 1
        %s2068 = smul.addr %s2067, 16
        %s2069 = scalar_lea.vmem [#allocation11], %s2068
        // Predicated region
        $region73: #{tpu_custom_call.1} parent=43 // pred_check
          %p2070 = pneg %p181
        $region74: #{tpu_custom_call.1} parent=43 // pred_check_branch
          %2072 = sbr.rel (%p2070) target = $region76
        $region75: #{tpu_custom_call.1} parent=43 // pred_region
          %s2073 = smul.u32 4, %s28
          %s2075 = ssub.s32 256, 256
          %2076 = vsyncadd %s2066, %s2075
          %s2077 = smul.addr %s27, 12
          %s2078 = sadd.s32 %s2073, %s2077
          %s2079 = smul.addr %s2078, 64
          %s2080 = scalar_lea.hbm %s7, %s2079
          %s2081 = sshll.u32 %s2069, 4
          %s2082 = int_to_ptr.vmem [resolvable:$true] %s2081
          %2087 = dma.vmem_to_hbm [thread:$0]  %s2082, 256, %s2080, %s2066, 64, 64, 4
        $region76: #{tpu_custom_call.1} parent=43 // pred_fallthru
          _
      $region44: #{tpu_custom_call.1} parent=5 // pred_fallthru
        _
      %p2088 = scmp.le.s32.totalorder 2, %s18
      // Predicated region
      $region77: #{tpu_custom_call.1} parent=5 // pred_check
        %p2089 = pneg %p2088
      $region78: #{tpu_custom_call.1} parent=5 // pred_check_branch
        %2091 = sbr.rel (%p2089) target = $region80
      $region79: #{tpu_custom_call.1} parent=5 // pred_region
        %s2092 = ssub.s32 %s18, 2
        // Predicated region
        $region81: #{tpu_custom_call.1} parent=79 // pred_check
          %p2093 = pneg %p187
        $region82: #{tpu_custom_call.1} parent=79 // pred_check_branch
          %2095 = sbr.rel (%p2093) target = $region84
        $region83: #{tpu_custom_call.1} parent=79 // pred_region
          %s2096 = sand.u32 %s172, 1
          %s2097 = scalar_lea.sflag [#allocation7], %s2096
          %s2098 = sand.u32 %s172, 1
          %s2099 = smul.addr %s2098, 16
          %s2100 = scalar_lea.vmem [#allocation11], %s2099
          %2101 = dma.done %s2097, 256
        $region84: #{tpu_custom_call.1} parent=79 // pred_fallthru
          _
      $region80: #{tpu_custom_call.1} parent=5 // pred_fallthru
        _
    $region6: #{tpu_custom_call.1} parent=1 // loop_footer
      %s22 = sadd.s32 1, %s18
    $region7: #{tpu_custom_call.1} parent=1 // loop_footer_branch
      %17 = sbr.rel target = $region3
    $region8: #{tpu_custom_call.1} parent=1 // loop_exit
      _
    %2102 = vsyncpa [#allocation6], 1
    %s2103 = scalar_lea.sflag [#allocation6], 1
    %2104 = vsyncpa %s2103, 1
    %2105 = vsyncpa [#allocation9], 1
    %2106 = vsyncpa [#allocation7], 1
    %s2107 = scalar_lea.sflag [#allocation7], 1
    %2108 = vsyncpa %s2107, 1
  %2109 = vsyncmov [#allocation4]
  %s2110 = vpop.sfrf %2109
  %p2111 = scmp.eq.s32.totalorder %s2110, 0
  %p2112 = pneg %p2111
  %2114 = shalt.err (%p2112)
  %s2115 = scalar_lea.sflag [#allocation4], 1
  %2116 = vsyncmov %s2115
  %s2117 = vpop.sfrf %2116
  %p2118 = scmp.eq.s32.totalorder %s2117, 0
  %p2119 = pneg %p2118
  %2121 = shalt.err (%p2119)

</llo_original>
